<compile_context>
chip_gen: v5e
topology: v5e:2x2
jax: 0.10.0
libtpu: 0.0.40
codegen_flags: <defaults>
</compile_context>

<pallas_src>
import jax
import jax.numpy as jnp
from jax.experimental import pallas as pl
from jax.experimental.pallas import tpu as pltpu


# Phase selection matrix A[phase, d, k]: which of the three 1-D conv taps k
# contribute to neighbour offset d (0 or 1) for output parity `phase`.
_PHASE_SEL = jnp.array(
    [[[1.0, 0.0, 0.0], [0.0, 1.0, 1.0]],    # phase 0: {k0} , {k1,k2}
     [[1.0, 1.0, 0.0], [0.0, 0.0, 1.0]]],   # phase 1: {k0,k1}, {k2}
    dtype=jnp.float32)


def _upsample_conv_kernel(xm_ref, xh0_ref, xh1_ref, wp_ref, b_ref, o_ref):
    """One (batch, row-strip) grid step.

    xm_ref : (1, T,   W+2, C)  strip of the zero-padded original-res input
    xh0_ref: (1, 1,   W+2, C)  halo row T   (first row of the next strip)
    xh1_ref: (1, 1,   W+2, C)  halo row T+1
    wp_ref : (16, C, C)        phase weights, tap = ((pr*2+pw)*2+dy)*2+dx
    b_ref  : (1, C)            bias (f32)
    o_ref  : (1, 4, T, W, C)   phase-major output block, phase = pr*2+pw
    """
    T = xm_ref.shape[1]
    C = xm_ref.shape[3]
    W = o_ref.shape[3]

    # Halo'd (T+2, W+2, C) strip; concat is along the untiled major dim.
    x_local = jnp.concatenate([xm_ref[0], xh0_ref[0], xh1_ref[0]], axis=0)
    bias = b_ref[...].astype(jnp.float32)                       # (1, C)

    for pr in range(2):
        for pw in range(2):
            # Bias folded into the accumulator init.
            acc = jnp.broadcast_to(bias, (T * W, C))
            for dy in range(2):
                for dx in range(2):
                    tap = ((pr * 2 + pw) * 2 + dy) * 2 + dx
                    patch = x_local[pr + dy:pr + dy + T,
                                    pw + dx:pw + dx + W, :]
                    acc = acc + jnp.dot(patch.reshape(T * W, C),
                                        wp_ref[tap],
                                        preferred_element_type=jnp.float32)
            o_ref[0, pr * 2 + pw] = acc.reshape(T, W, C).astype(o_ref.dtype)


def _auto_row_block(H, W, C, itemsize, budget_bytes=24 * 1024 * 1024):
    """Largest divisor of H whose per-step working set fits ~budget_bytes.

    Rough model: double-buffered input strip + double-buffered 4-phase output
    block + f32 in-kernel temporaries.  Sized with headroom for v7x
    (64 MiB physical / 32 MiB scoped VMEM); v5e/v6e have more.
    """
    per_row = C * (
        2 * (W + 2) * itemsize        # input strip, x2 (pipelining)
        + 2 * 4 * W * itemsize        # phase-major output block, x2
        + 4 * (W + 2)                 # halo'd strip temporary (f32)
        + 12 * W)                     # accumulators / patch temporaries (f32)
    best = 1
    for d in range(1, H + 1):
        if H % d == 0 and d * per_row <= budget_bytes:
            best = d
    return best


def upsample_forward(x_nchw, weight, bias, *, row_block=None,
                     compute_dtype=None):
    """Nearest x2 upsample followed by 3x3 same-padding conv (PyTorch semantics).

    x_nchw: (N, C, H, W) float32
    weight: (C, C, 3, 3) float32  (PyTorch OIHW layout)
    bias:   (C,) float32
    returns (N, C, 2H, 2W) in x's dtype.
    """
    N, C, H, W = x_nchw.shape
    Ho, Wo = 2 * H, 2 * W

    cdt = x_nchw.dtype if compute_dtype is None else compute_dtype
    itemsize = jnp.dtype(cdt).itemsize
    if row_block is None:
        row_block = _auto_row_block(H, W, C, itemsize)
    assert H % row_block == 0, (H, row_block)
    T = row_block
    S = H // T

    # Effective 2x2 phase weights: Wp[pr, pw, dy, dx, cin, cout], flattened to
    # (16, C, C).  OIHW -> (ky, kx, cin, cout) first.
    w_kkio = jnp.transpose(weight, (2, 3, 1, 0)).astype(jnp.float32)
    wp = jnp.einsum('pyk,qxl,klio->pqyxio', _PHASE_SEL, _PHASE_SEL, w_kkio)
    wp = wp.reshape(16, C, C).astype(cdt)

    # NCHW -> NHWC (channels on lanes) and 1-px zero halo of the *original*
    # (pre-upsample) image.  This is the only HBM-side prep; the 4x upsampled
    # tensor never exists.
    x = jnp.transpose(x_nchw, (0, 2, 3, 1))
    x_pad = jnp.pad(x, ((0, 0), (1, 1), (1, 1), (0, 0))).astype(cdt)

    b2 = bias.reshape(1, C).astype(jnp.float32)

    out_phase = pl.pallas_call(
        _upsample_conv_kernel,
        out_shape=jax.ShapeDtypeStruct((N, 4, H, W, C), x_nchw.dtype),
        grid_spec=pltpu.PrefetchScalarGridSpec(
            num_scalar_prefetch=0,
            grid=(N, S),
            in_specs=[
                # main strip: rows [s*T, (s+1)*T) of x_pad
                pl.BlockSpec((1, T, W + 2, C), lambda n, s: (n, s, 0, 0)),
                # halo rows (s+1)*T and (s+1)*T + 1 (single-row blocks, so the
                # element row index is the block index)
                pl.BlockSpec((1, 1, W + 2, C),
                             lambda n, s: (n, (s + 1) * T, 0, 0)),
                pl.BlockSpec((1, 1, W + 2, C),
                             lambda n, s: (n, (s + 1) * T + 1, 0, 0)),
                pl.BlockSpec((16, C, C), lambda n, s: (0, 0, 0)),
                pl.BlockSpec((1, C), lambda n, s: (0, 0)),
            ],
            out_specs=pl.BlockSpec((1, 4, T, W, C),
                                   lambda n, s: (n, 0, s, 0, 0)),
        ),
        compiler_params=pltpu.CompilerParams(
            dimension_semantics=("parallel", "parallel"),
            vmem_limit_bytes=48 * 1024 * 1024),
    )(x_pad, x_pad, x_pad, wp, b2)

    # Phase re-interleave fused with the (API-mandated) NHWC->NCHW transpose:
    # out_phase[n, pr*2+pw, i, j, c] -> y[n, c, 2i+pr, 2j+pw]
    y = out_phase.reshape(N, 2, 2, H, W, C)
    y = jnp.transpose(y, (0, 5, 3, 1, 4, 2)).reshape(N, C, Ho, Wo)
    return y


def _reference_forward(x_nchw, weight, bias):
    """Pure-JAX reference (nearest x2 upsample + conv) for validation."""
    N, C, H, W = x_nchw.shape
    x_up = jnp.repeat(jnp.repeat(x_nchw, 2, axis=2), 2, axis=3)
    out = jax.lax.conv_general_dilated(
        x_up, weight, window_strides=(1, 1), padding=((1, 1), (1, 1)),
        dimension_numbers=("NCHW", "OIHW", "NCHW"))
    return out + bias.reshape(1, C, 1, 1)


if __name__ == "__main__":
    # Small, deterministic example consistent with the module.
    N, C, H, W = 2, 4, 16, 16
    key = jax.random.PRNGKey(0)
    kx, kw, kb = jax.random.split(key, 3)

    x = jax.random.normal(kx, (N, C, H, W), dtype=jnp.float32)

    # Deterministic param init mimicking nn.Conv2d defaults
    # (uniform in +/- 1/sqrt(fan_in), fan_in = C*3*3).
    fan_in = C * 3 * 3
    bound = 1.0 / (fan_in ** 0.5)
    weight = jax.random.uniform(kw, (C, C, 3, 3), jnp.float32, -bound, bound)
    bias = jax.random.uniform(kb, (C,), jnp.float32, -bound, bound)

    # row_block=8 exercises the multi-strip (halo) path: grid = (2, 2).
    out = jax.block_until_ready(upsample_forward(x, weight, bias, row_block=8))
    ref = jax.block_until_ready(_reference_forward(x, weight, bias))

    assert out.shape == (N, C, 2 * H, 2 * W), out.shape
    max_err = float(jnp.max(jnp.abs(out - ref)))
    assert jnp.allclose(out, ref, atol=1e-4, rtol=1e-4), max_err

    print("KERNEL_OK")
</pallas_src>

<mosaic_0001>
module attributes {stable_mosaic.version = 11 : i64} {
  func.func @_upsample_conv_kernel(%arg0: i32, %arg1: i32, %arg2: memref<1x8x18x4xf32, #tpu.memory_space<vmem>>, %arg3: memref<1x1x18x4xf32, #tpu.memory_space<vmem>>, %arg4: memref<1x1x18x4xf32, #tpu.memory_space<vmem>>, %arg5: memref<16x4x4xf32, #tpu.memory_space<vmem>>, %arg6: memref<1x4xf32, #tpu.memory_space<vmem>>, %arg7: memref<1x4x8x16x4xf32, #tpu.memory_space<vmem>>) attributes {dimension_semantics = [#tpu.dimension_semantics<parallel>, #tpu.dimension_semantics<parallel>], iteration_bounds = array<i64: 2, 2>, scalar_prefetch = 0 : i64, scratch_operands = 0 : i64, tpu.core_type = #tpu.core_type<tc>, window_params = [{transform_indices = @transform_0, window_bounds = array<i64: 1, 8, 18, 4>}, {transform_indices = @transform_1, window_bounds = array<i64: 1, 1, 18, 4>}, {transform_indices = @transform_2, window_bounds = array<i64: 1, 1, 18, 4>}, {pipeline_mode = #tpu.pipeline_mode<synchronous>, transform_indices = @transform_3, window_bounds = array<i64: 16, 4, 4>}, {pipeline_mode = #tpu.pipeline_mode<synchronous>, transform_indices = @transform_4, window_bounds = array<i64: 1, 4>}, {transform_indices = @transform_5, window_bounds = array<i64: 1, 4, 8, 16, 4>}]} {
    %c0 = arith.constant 0 : index
    %c0_0 = arith.constant 0 : index
    %c0_1 = arith.constant 0 : index
    %c0_2 = arith.constant 0 : index
    %0 = vector.load %arg2[%c0, %c0_0, %c0_1, %c0_2] : memref<1x8x18x4xf32, #tpu.memory_space<vmem>>, vector<1x8x18x4xf32>
    %1 = vector.shape_cast %0 : vector<1x8x18x4xf32> to vector<8x18x4xf32>
    %c0_3 = arith.constant 0 : index
    %c0_4 = arith.constant 0 : index
    %c0_5 = arith.constant 0 : index
    %c0_6 = arith.constant 0 : index
    %2 = vector.load %arg3[%c0_3, %c0_4, %c0_5, %c0_6] : memref<1x1x18x4xf32, #tpu.memory_space<vmem>>, vector<1x1x18x4xf32>
    %3 = vector.shape_cast %2 : vector<1x1x18x4xf32> to vector<1x18x4xf32>
    %c0_7 = arith.constant 0 : index
    %c0_8 = arith.constant 0 : index
    %c0_9 = arith.constant 0 : index
    %c0_10 = arith.constant 0 : index
    %4 = vector.load %arg4[%c0_7, %c0_8, %c0_9, %c0_10] : memref<1x1x18x4xf32, #tpu.memory_space<vmem>>, vector<1x1x18x4xf32>
    %5 = vector.shape_cast %4 : vector<1x1x18x4xf32> to vector<1x18x4xf32>
    %6 = tpu.concatenate %1, %3, %5 in 0 : vector<8x18x4xf32>, vector<1x18x4xf32>, vector<1x18x4xf32> -> vector<10x18x4xf32>
    %c0_11 = arith.constant 0 : index
    %c0_12 = arith.constant 0 : index
    %7 = vector.load %arg6[%c0_11, %c0_12] : memref<1x4xf32, #tpu.memory_space<vmem>>, vector<1x4xf32>
    %8 = vector.shape_cast %7 : vector<1x4xf32> to vector<1x4xf32>
    %9 = vector.broadcast %8 : vector<1x4xf32> to vector<128x4xf32>
    %10 = vector.extract_strided_slice %6 {offsets = [0, 0, 0], sizes = [8, 16, 4], strides = [1, 1, 1]} : vector<10x18x4xf32> to vector<8x16x4xf32>
    %11 = vector.shape_cast %10 : vector<8x16x4xf32> to vector<128x4xf32>
    %c0_13 = arith.constant 0 : index
    %c0_14 = arith.constant 0 : index
    %c0_15 = arith.constant 0 : index
    %12 = vector.load %arg5[%c0_13, %c0_14, %c0_15] : memref<16x4x4xf32, #tpu.memory_space<vmem>>, vector<1x4x4xf32>
    %13 = vector.shape_cast %12 : vector<1x4x4xf32> to vector<4x4xf32>
    %cst = arith.constant dense<0.000000e+00> : vector<128x4xf32>
    %14 = tpu.matmul %11, %13, %cst {dimension_numbers = #tpu.dot_dimension_numbers<[1], [0], [0], [1], [0, 0, 1, 1], [], []>} : vector<128x4xf32>, vector<4x4xf32>, vector<128x4xf32> -> vector<128x4xf32>
    %15 = arith.addf %9, %14 : vector<128x4xf32>
    %16 = vector.extract_strided_slice %6 {offsets = [0, 1, 0], sizes = [8, 16, 4], strides = [1, 1, 1]} : vector<10x18x4xf32> to vector<8x16x4xf32>
    %17 = vector.shape_cast %16 : vector<8x16x4xf32> to vector<128x4xf32>
    %c1 = arith.constant 1 : index
    %c0_16 = arith.constant 0 : index
    %c0_17 = arith.constant 0 : index
    %18 = vector.load %arg5[%c1, %c0_16, %c0_17] : memref<16x4x4xf32, #tpu.memory_space<vmem>>, vector<1x4x4xf32>
    %19 = vector.shape_cast %18 : vector<1x4x4xf32> to vector<4x4xf32>
    %cst_18 = arith.constant dense<0.000000e+00> : vector<128x4xf32>
    %20 = tpu.matmul %17, %19, %cst_18 {dimension_numbers = #tpu.dot_dimension_numbers<[1], [0], [0], [1], [0, 0, 1, 1], [], []>} : vector<128x4xf32>, vector<4x4xf32>, vector<128x4xf32> -> vector<128x4xf32>
    %21 = arith.addf %15, %20 : vector<128x4xf32>
    %22 = vector.extract_strided_slice %6 {offsets = [1, 0, 0], sizes = [8, 16, 4], strides = [1, 1, 1]} : vector<10x18x4xf32> to vector<8x16x4xf32>
    %23 = vector.shape_cast %22 : vector<8x16x4xf32> to vector<128x4xf32>
    %c2 = arith.constant 2 : index
    %c0_19 = arith.constant 0 : index
    %c0_20 = arith.constant 0 : index
    %24 = vector.load %arg5[%c2, %c0_19, %c0_20] : memref<16x4x4xf32, #tpu.memory_space<vmem>>, vector<1x4x4xf32>
    %25 = vector.shape_cast %24 : vector<1x4x4xf32> to vector<4x4xf32>
    %cst_21 = arith.constant dense<0.000000e+00> : vector<128x4xf32>
    %26 = tpu.matmul %23, %25, %cst_21 {dimension_numbers = #tpu.dot_dimension_numbers<[1], [0], [0], [1], [0, 0, 1, 1], [], []>} : vector<128x4xf32>, vector<4x4xf32>, vector<128x4xf32> -> vector<128x4xf32>
    %27 = arith.addf %21, %26 : vector<128x4xf32>
    %28 = vector.extract_strided_slice %6 {offsets = [1, 1, 0], sizes = [8, 16, 4], strides = [1, 1, 1]} : vector<10x18x4xf32> to vector<8x16x4xf32>
    %29 = vector.shape_cast %28 : vector<8x16x4xf32> to vector<128x4xf32>
    %c3 = arith.constant 3 : index
    %c0_22 = arith.constant 0 : index
    %c0_23 = arith.constant 0 : index
    %30 = vector.load %arg5[%c3, %c0_22, %c0_23] : memref<16x4x4xf32, #tpu.memory_space<vmem>>, vector<1x4x4xf32>
    %31 = vector.shape_cast %30 : vector<1x4x4xf32> to vector<4x4xf32>
    %cst_24 = arith.constant dense<0.000000e+00> : vector<128x4xf32>
    %32 = tpu.matmul %29, %31, %cst_24 {dimension_numbers = #tpu.dot_dimension_numbers<[1], [0], [0], [1], [0, 0, 1, 1], [], []>} : vector<128x4xf32>, vector<4x4xf32>, vector<128x4xf32> -> vector<128x4xf32>
    %33 = arith.addf %27, %32 : vector<128x4xf32>
    %34 = vector.shape_cast %33 : vector<128x4xf32> to vector<8x16x4xf32>
    %c0_25 = arith.constant 0 : index
    %c0_26 = arith.constant 0 : index
    %c0_27 = arith.constant 0 : index
    %c0_28 = arith.constant 0 : index
    %c0_29 = arith.constant 0 : index
    %35 = vector.load %arg7[%c0_25, %c0_26, %c0_27, %c0_28, %c0_29] : memref<1x4x8x16x4xf32, #tpu.memory_space<vmem>>, vector<1x1x8x16x4xf32>
    %36 = vector.shape_cast %35 : vector<1x1x8x16x4xf32> to vector<8x16x4xf32>
    %37 = vector.shape_cast %34 : vector<8x16x4xf32> to vector<1x1x8x16x4xf32>
    tpu.vector_store %arg7[%c0_25, %c0_26, %c0_27, %c0_28, %c0_29], %37 {strides = array<i32>} : memref<1x4x8x16x4xf32, #tpu.memory_space<vmem>>, vector<1x1x8x16x4xf32>,
    %38 = vector.shape_cast %7 : vector<1x4xf32> to vector<1x4xf32>
    %39 = vector.broadcast %38 : vector<1x4xf32> to vector<128x4xf32>
    %40 = vector.extract_strided_slice %6 {offsets = [0, 1, 0], sizes = [8, 16, 4], strides = [1, 1, 1]} : vector<10x18x4xf32> to vector<8x16x4xf32>
    %41 = vector.shape_cast %40 : vector<8x16x4xf32> to vector<128x4xf32>
    %c4 = arith.constant 4 : index
    %c0_30 = arith.constant 0 : index
    %c0_31 = arith.constant 0 : index
    %42 = vector.load %arg5[%c4, %c0_30, %c0_31] : memref<16x4x4xf32, #tpu.memory_space<vmem>>, vector<1x4x4xf32>
    %43 = vector.shape_cast %42 : vector<1x4x4xf32> to vector<4x4xf32>
    %cst_32 = arith.constant dense<0.000000e+00> : vector<128x4xf32>
    %44 = tpu.matmul %41, %43, %cst_32 {dimension_numbers = #tpu.dot_dimension_numbers<[1], [0], [0], [1], [0, 0, 1, 1], [], []>} : vector<128x4xf32>, vector<4x4xf32>, vector<128x4xf32> -> vector<128x4xf32>
    %45 = arith.addf %39, %44 : vector<128x4xf32>
    %46 = vector.extract_strided_slice %6 {offsets = [0, 2, 0], sizes = [8, 16, 4], strides = [1, 1, 1]} : vector<10x18x4xf32> to vector<8x16x4xf32>
    %47 = vector.shape_cast %46 : vector<8x16x4xf32> to vector<128x4xf32>
    %c5 = arith.constant 5 : index
    %c0_33 = arith.constant 0 : index
    %c0_34 = arith.constant 0 : index
    %48 = vector.load %arg5[%c5, %c0_33, %c0_34] : memref<16x4x4xf32, #tpu.memory_space<vmem>>, vector<1x4x4xf32>
    %49 = vector.shape_cast %48 : vector<1x4x4xf32> to vector<4x4xf32>
    %cst_35 = arith.constant dense<0.000000e+00> : vector<128x4xf32>
    %50 = tpu.matmul %47, %49, %cst_35 {dimension_numbers = #tpu.dot_dimension_numbers<[1], [0], [0], [1], [0, 0, 1, 1], [], []>} : vector<128x4xf32>, vector<4x4xf32>, vector<128x4xf32> -> vector<128x4xf32>
    %51 = arith.addf %45, %50 : vector<128x4xf32>
    %52 = vector.extract_strided_slice %6 {offsets = [1, 1, 0], sizes = [8, 16, 4], strides = [1, 1, 1]} : vector<10x18x4xf32> to vector<8x16x4xf32>
    %53 = vector.shape_cast %52 : vector<8x16x4xf32> to vector<128x4xf32>
    %c6 = arith.constant 6 : index
    %c0_36 = arith.constant 0 : index
    %c0_37 = arith.constant 0 : index
    %54 = vector.load %arg5[%c6, %c0_36, %c0_37] : memref<16x4x4xf32, #tpu.memory_space<vmem>>, vector<1x4x4xf32>
    %55 = vector.shape_cast %54 : vector<1x4x4xf32> to vector<4x4xf32>
    %cst_38 = arith.constant dense<0.000000e+00> : vector<128x4xf32>
    %56 = tpu.matmul %53, %55, %cst_38 {dimension_numbers = #tpu.dot_dimension_numbers<[1], [0], [0], [1], [0, 0, 1, 1], [], []>} : vector<128x4xf32>, vector<4x4xf32>, vector<128x4xf32> -> vector<128x4xf32>
    %57 = arith.addf %51, %56 : vector<128x4xf32>
    %58 = vector.extract_strided_slice %6 {offsets = [1, 2, 0], sizes = [8, 16, 4], strides = [1, 1, 1]} : vector<10x18x4xf32> to vector<8x16x4xf32>
    %59 = vector.shape_cast %58 : vector<8x16x4xf32> to vector<128x4xf32>
    %c7 = arith.constant 7 : index
    %c0_39 = arith.constant 0 : index
    %c0_40 = arith.constant 0 : index
    %60 = vector.load %arg5[%c7, %c0_39, %c0_40] : memref<16x4x4xf32, #tpu.memory_space<vmem>>, vector<1x4x4xf32>
    %61 = vector.shape_cast %60 : vector<1x4x4xf32> to vector<4x4xf32>
    %cst_41 = arith.constant dense<0.000000e+00> : vector<128x4xf32>
    %62 = tpu.matmul %59, %61, %cst_41 {dimension_numbers = #tpu.dot_dimension_numbers<[1], [0], [0], [1], [0, 0, 1, 1], [], []>} : vector<128x4xf32>, vector<4x4xf32>, vector<128x4xf32> -> vector<128x4xf32>
    %63 = arith.addf %57, %62 : vector<128x4xf32>
    %64 = vector.shape_cast %63 : vector<128x4xf32> to vector<8x16x4xf32>
    %c0_42 = arith.constant 0 : index
    %c1_43 = arith.constant 1 : index
    %c0_44 = arith.constant 0 : index
    %c0_45 = arith.constant 0 : index
    %c0_46 = arith.constant 0 : index
    %65 = vector.load %arg7[%c0_42, %c1_43, %c0_44, %c0_45, %c0_46] : memref<1x4x8x16x4xf32, #tpu.memory_space<vmem>>, vector<1x1x8x16x4xf32>
    %66 = vector.shape_cast %65 : vector<1x1x8x16x4xf32> to vector<8x16x4xf32>
    %67 = vector.shape_cast %64 : vector<8x16x4xf32> to vector<1x1x8x16x4xf32>
    tpu.vector_store %arg7[%c0_42, %c1_43, %c0_44, %c0_45, %c0_46], %67 {strides = array<i32>} : memref<1x4x8x16x4xf32, #tpu.memory_space<vmem>>, vector<1x1x8x16x4xf32>,
    %68 = vector.shape_cast %7 : vector<1x4xf32> to vector<1x4xf32>
    %69 = vector.broadcast %68 : vector<1x4xf32> to vector<128x4xf32>
    %70 = vector.extract_strided_slice %6 {offsets = [1, 0, 0], sizes = [8, 16, 4], strides = [1, 1, 1]} : vector<10x18x4xf32> to vector<8x16x4xf32>
    %71 = vector.shape_cast %70 : vector<8x16x4xf32> to vector<128x4xf32>
    %c8 = arith.constant 8 : index
    %c0_47 = arith.constant 0 : index
    %c0_48 = arith.constant 0 : index
    %72 = vector.load %arg5[%c8, %c0_47, %c0_48] : memref<16x4x4xf32, #tpu.memory_space<vmem>>, vector<1x4x4xf32>
    %73 = vector.shape_cast %72 : vector<1x4x4xf32> to vector<4x4xf32>
    %cst_49 = arith.constant dense<0.000000e+00> : vector<128x4xf32>
    %74 = tpu.matmul %71, %73, %cst_49 {dimension_numbers = #tpu.dot_dimension_numbers<[1], [0], [0], [1], [0, 0, 1, 1], [], []>} : vector<128x4xf32>, vector<4x4xf32>, vector<128x4xf32> -> vector<128x4xf32>
    %75 = arith.addf %69, %74 : vector<128x4xf32>
    %76 = vector.extract_strided_slice %6 {offsets = [1, 1, 0], sizes = [8, 16, 4], strides = [1, 1, 1]} : vector<10x18x4xf32> to vector<8x16x4xf32>
    %77 = vector.shape_cast %76 : vector<8x16x4xf32> to vector<128x4xf32>
    %c9 = arith.constant 9 : index
    %c0_50 = arith.constant 0 : index
    %c0_51 = arith.constant 0 : index
    %78 = vector.load %arg5[%c9, %c0_50, %c0_51] : memref<16x4x4xf32, #tpu.memory_space<vmem>>, vector<1x4x4xf32>
    %79 = vector.shape_cast %78 : vector<1x4x4xf32> to vector<4x4xf32>
    %cst_52 = arith.constant dense<0.000000e+00> : vector<128x4xf32>
    %80 = tpu.matmul %77, %79, %cst_52 {dimension_numbers = #tpu.dot_dimension_numbers<[1], [0], [0], [1], [0, 0, 1, 1], [], []>} : vector<128x4xf32>, vector<4x4xf32>, vector<128x4xf32> -> vector<128x4xf32>
    %81 = arith.addf %75, %80 : vector<128x4xf32>
    %82 = vector.extract_strided_slice %6 {offsets = [2, 0, 0], sizes = [8, 16, 4], strides = [1, 1, 1]} : vector<10x18x4xf32> to vector<8x16x4xf32>
    %83 = vector.shape_cast %82 : vector<8x16x4xf32> to vector<128x4xf32>
    %c10 = arith.constant 10 : index
    %c0_53 = arith.constant 0 : index
    %c0_54 = arith.constant 0 : index
    %84 = vector.load %arg5[%c10, %c0_53, %c0_54] : memref<16x4x4xf32, #tpu.memory_space<vmem>>, vector<1x4x4xf32>
    %85 = vector.shape_cast %84 : vector<1x4x4xf32> to vector<4x4xf32>
    %cst_55 = arith.constant dense<0.000000e+00> : vector<128x4xf32>
    %86 = tpu.matmul %83, %85, %cst_55 {dimension_numbers = #tpu.dot_dimension_numbers<[1], [0], [0], [1], [0, 0, 1, 1], [], []>} : vector<128x4xf32>, vector<4x4xf32>, vector<128x4xf32> -> vector<128x4xf32>
    %87 = arith.addf %81, %86 : vector<128x4xf32>
    %88 = vector.extract_strided_slice %6 {offsets = [2, 1, 0], sizes = [8, 16, 4], strides = [1, 1, 1]} : vector<10x18x4xf32> to vector<8x16x4xf32>
    %89 = vector.shape_cast %88 : vector<8x16x4xf32> to vector<128x4xf32>
    %c11 = arith.constant 11 : index
    %c0_56 = arith.constant 0 : index
    %c0_57 = arith.constant 0 : index
    %90 = vector.load %arg5[%c11, %c0_56, %c0_57] : memref<16x4x4xf32, #tpu.memory_space<vmem>>, vector<1x4x4xf32>
    %91 = vector.shape_cast %90 : vector<1x4x4xf32> to vector<4x4xf32>
    %cst_58 = arith.constant dense<0.000000e+00> : vector<128x4xf32>
    %92 = tpu.matmul %89, %91, %cst_58 {dimension_numbers = #tpu.dot_dimension_numbers<[1], [0], [0], [1], [0, 0, 1, 1], [], []>} : vector<128x4xf32>, vector<4x4xf32>, vector<128x4xf32> -> vector<128x4xf32>
    %93 = arith.addf %87, %92 : vector<128x4xf32>
    %94 = vector.shape_cast %93 : vector<128x4xf32> to vector<8x16x4xf32>
    %c0_59 = arith.constant 0 : index
    %c2_60 = arith.constant 2 : index
    %c0_61 = arith.constant 0 : index
    %c0_62 = arith.constant 0 : index
    %c0_63 = arith.constant 0 : index
    %95 = vector.load %arg7[%c0_59, %c2_60, %c0_61, %c0_62, %c0_63] : memref<1x4x8x16x4xf32, #tpu.memory_space<vmem>>, vector<1x1x8x16x4xf32>
    %96 = vector.shape_cast %95 : vector<1x1x8x16x4xf32> to vector<8x16x4xf32>
    %97 = vector.shape_cast %94 : vector<8x16x4xf32> to vector<1x1x8x16x4xf32>
    tpu.vector_store %arg7[%c0_59, %c2_60, %c0_61, %c0_62, %c0_63], %97 {strides = array<i32>} : memref<1x4x8x16x4xf32, #tpu.memory_space<vmem>>, vector<1x1x8x16x4xf32>,
    %98 = vector.shape_cast %7 : vector<1x4xf32> to vector<1x4xf32>
    %99 = vector.broadcast %98 : vector<1x4xf32> to vector<128x4xf32>
    %100 = vector.extract_strided_slice %6 {offsets = [1, 1, 0], sizes = [8, 16, 4], strides = [1, 1, 1]} : vector<10x18x4xf32> to vector<8x16x4xf32>
    %101 = vector.shape_cast %100 : vector<8x16x4xf32> to vector<128x4xf32>
    %c12 = arith.constant 12 : index
    %c0_64 = arith.constant 0 : index
    %c0_65 = arith.constant 0 : index
    %102 = vector.load %arg5[%c12, %c0_64, %c0_65] : memref<16x4x4xf32, #tpu.memory_space<vmem>>, vector<1x4x4xf32>
    %103 = vector.shape_cast %102 : vector<1x4x4xf32> to vector<4x4xf32>
    %cst_66 = arith.constant dense<0.000000e+00> : vector<128x4xf32>
    %104 = tpu.matmul %101, %103, %cst_66 {dimension_numbers = #tpu.dot_dimension_numbers<[1], [0], [0], [1], [0, 0, 1, 1], [], []>} : vector<128x4xf32>, vector<4x4xf32>, vector<128x4xf32> -> vector<128x4xf32>
    %105 = arith.addf %99, %104 : vector<128x4xf32>
    %106 = vector.extract_strided_slice %6 {offsets = [1, 2, 0], sizes = [8, 16, 4], strides = [1, 1, 1]} : vector<10x18x4xf32> to vector<8x16x4xf32>
    %107 = vector.shape_cast %106 : vector<8x16x4xf32> to vector<128x4xf32>
    %c13 = arith.constant 13 : index
    %c0_67 = arith.constant 0 : index
    %c0_68 = arith.constant 0 : index
    %108 = vector.load %arg5[%c13, %c0_67, %c0_68] : memref<16x4x4xf32, #tpu.memory_space<vmem>>, vector<1x4x4xf32>
    %109 = vector.shape_cast %108 : vector<1x4x4xf32> to vector<4x4xf32>
    %cst_69 = arith.constant dense<0.000000e+00> : vector<128x4xf32>
    %110 = tpu.matmul %107, %109, %cst_69 {dimension_numbers = #tpu.dot_dimension_numbers<[1], [0], [0], [1], [0, 0, 1, 1], [], []>} : vector<128x4xf32>, vector<4x4xf32>, vector<128x4xf32> -> vector<128x4xf32>
    %111 = arith.addf %105, %110 : vector<128x4xf32>
    %112 = vector.extract_strided_slice %6 {offsets = [2, 1, 0], sizes = [8, 16, 4], strides = [1, 1, 1]} : vector<10x18x4xf32> to vector<8x16x4xf32>
    %113 = vector.shape_cast %112 : vector<8x16x4xf32> to vector<128x4xf32>
    %c14 = arith.constant 14 : index
    %c0_70 = arith.constant 0 : index
    %c0_71 = arith.constant 0 : index
    %114 = vector.load %arg5[%c14, %c0_70, %c0_71] : memref<16x4x4xf32, #tpu.memory_space<vmem>>, vector<1x4x4xf32>
    %115 = vector.shape_cast %114 : vector<1x4x4xf32> to vector<4x4xf32>
    %cst_72 = arith.constant dense<0.000000e+00> : vector<128x4xf32>
    %116 = tpu.matmul %113, %115, %cst_72 {dimension_numbers = #tpu.dot_dimension_numbers<[1], [0], [0], [1], [0, 0, 1, 1], [], []>} : vector<128x4xf32>, vector<4x4xf32>, vector<128x4xf32> -> vector<128x4xf32>
    %117 = arith.addf %111, %116 : vector<128x4xf32>
    %118 = vector.extract_strided_slice %6 {offsets = [2, 2, 0], sizes = [8, 16, 4], strides = [1, 1, 1]} : vector<10x18x4xf32> to vector<8x16x4xf32>
    %119 = vector.shape_cast %118 : vector<8x16x4xf32> to vector<128x4xf32>
    %c15 = arith.constant 15 : index
    %c0_73 = arith.constant 0 : index
    %c0_74 = arith.constant 0 : index
    %120 = vector.load %arg5[%c15, %c0_73, %c0_74] : memref<16x4x4xf32, #tpu.memory_space<vmem>>, vector<1x4x4xf32>
    %121 = vector.shape_cast %120 : vector<1x4x4xf32> to vector<4x4xf32>
    %cst_75 = arith.constant dense<0.000000e+00> : vector<128x4xf32>
    %122 = tpu.matmul %119, %121, %cst_75 {dimension_numbers = #tpu.dot_dimension_numbers<[1], [0], [0], [1], [0, 0, 1, 1], [], []>} : vector<128x4xf32>, vector<4x4xf32>, vector<128x4xf32> -> vector<128x4xf32>
    %123 = arith.addf %117, %122 : vector<128x4xf32>
    %124 = vector.shape_cast %123 : vector<128x4xf32> to vector<8x16x4xf32>
    %c0_76 = arith.constant 0 : index
    %c3_77 = arith.constant 3 : index
    %c0_78 = arith.constant 0 : index
    %c0_79 = arith.constant 0 : index
    %c0_80 = arith.constant 0 : index
    %125 = vector.load %arg7[%c0_76, %c3_77, %c0_78, %c0_79, %c0_80] : memref<1x4x8x16x4xf32, #tpu.memory_space<vmem>>, vector<1x1x8x16x4xf32>
    %126 = vector.shape_cast %125 : vector<1x1x8x16x4xf32> to vector<8x16x4xf32>
    %127 = vector.shape_cast %124 : vector<8x16x4xf32> to vector<1x1x8x16x4xf32>
    tpu.vector_store %arg7[%c0_76, %c3_77, %c0_78, %c0_79, %c0_80], %127 {strides = array<i32>} : memref<1x4x8x16x4xf32, #tpu.memory_space<vmem>>, vector<1x1x8x16x4xf32>,
    return
  }
  func.func @transform_0(%arg0: i32, %arg1: i32) -> (i32, i32, i32, i32) {
    %c0_i32 = arith.constant 0 : i32
    %c0_i32_0 = arith.constant 0 : i32
    %c0_i32_1 = arith.constant 0 : i32
    return %arg0, %arg1, %c0_i32, %c0_i32_0 : i32, i32, i32, i32
  }
  func.func @transform_1(%arg0: i32, %arg1: i32) -> (i32, i32, i32, i32) {
    %c1_i32 = arith.constant 1 : i32
    %0 = arith.addi %arg1, %c1_i32 : i32
    %c8_i32 = arith.constant 8 : i32
    %1 = arith.muli %0, %c8_i32 : i32
    %c0_i32 = arith.constant 0 : i32
    %c0_i32_0 = arith.constant 0 : i32
    %c0_i32_1 = arith.constant 0 : i32
    return %arg0, %1, %c0_i32, %c0_i32_0 : i32, i32, i32, i32
  }
  func.func @transform_2(%arg0: i32, %arg1: i32) -> (i32, i32, i32, i32) {
    %c1_i32 = arith.constant 1 : i32
    %0 = arith.addi %arg1, %c1_i32 : i32
    %c8_i32 = arith.constant 8 : i32
    %1 = arith.muli %0, %c8_i32 : i32
    %c1_i32_0 = arith.constant 1 : i32
    %2 = arith.addi %1, %c1_i32_0 : i32
    %c0_i32 = arith.constant 0 : i32
    %c0_i32_1 = arith.constant 0 : i32
    %c0_i32_2 = arith.constant 0 : i32
    return %arg0, %2, %c0_i32, %c0_i32_1 : i32, i32, i32, i32
  }
  func.func @transform_3(%arg0: i32, %arg1: i32) -> (i32, i32, i32) {
    %c0_i32 = arith.constant 0 : i32
    %c0_i32_0 = arith.constant 0 : i32
    %c0_i32_1 = arith.constant 0 : i32
    %c0_i32_2 = arith.constant 0 : i32
    return %c0_i32, %c0_i32_0, %c0_i32_1 : i32, i32, i32
  }
  func.func @transform_4(%arg0: i32, %arg1: i32) -> (i32, i32) {
    %c0_i32 = arith.constant 0 : i32
    %c0_i32_0 = arith.constant 0 : i32
    %c0_i32_1 = arith.constant 0 : i32
    return %c0_i32, %c0_i32_0 : i32, i32
  }
  func.func @transform_5(%arg0: i32, %arg1: i32) -> (i32, i32, i32, i32, i32) {
    %c0_i32 = arith.constant 0 : i32
    %c0_i32_0 = arith.constant 0 : i32
    %c0_i32_1 = arith.constant 0 : i32
    %c0_i32_2 = arith.constant 0 : i32
    return %arg0, %c0_i32, %arg1, %c0_i32_0, %c0_i32_1 : i32, i32, i32, i32, i32
  }
}

</mosaic_0001>

<llo_original>
// kernel: tpu_custom_call.1
$region0: #{tpu_custom_call.1}
  #allocation0 [shape = 'u32[]', space=smem, size = 0x4, offset = 0x4, fixed_abs, tag = 'smem constant byte address 0x4 - core index']
  #allocation1 [shape = 'u32[72,128]{1,0:T(1,128)}', space=vmem, size = 0x9000, scoped, tag = 'internal scratch']
  %s0 = inlined_call_operand.vmem [shape: f32[2,18,18,4], index: 0, kind: input, shape index: {}]
  %s1 = inlined_call_operand.vmem [shape: f32[2,18,18,4], index: 1, kind: input, shape index: {}]
  %s2 = inlined_call_operand.vmem [shape: f32[2,18,18,4], index: 2, kind: input, shape index: {}]
  %s3 = inlined_call_operand.vmem [shape: f32[16,4,4], index: 3, kind: input, shape index: {}]
  %s4 = inlined_call_operand.vmem [shape: f32[1,4], index: 4, kind: input, shape index: {}]
  %s5 = inlined_call_operand.vmem [shape: f32[2,4,16,16,4], index: 5, kind: output, shape index: {}]
  %s6 = sld [smem:[#allocation0]]
  $region87: #{tpu_custom_call.1} parent=0
    _
  %s8 = ssub.s32 1, %s6
  %s9 = scalar_select 0, %s8, %s6
  $region1: #{tpu_custom_call.1} parent=0
    #allocation2 [shape = 'u8[524288]{0}', space=vmem, size = 0x80000, scoped, tag = 'output window, operand 0']
    loop: start=0, step=1, limit=6
    $region2: #{tpu_custom_call.1} parent=1 // loop_pre_header
      _
    $region3: #{tpu_custom_call.1} parent=1 // loop_header
      %s11 = sphi 0, %s15
      %p12 = scmp.ge.s32.totalorder %s11, 6
      %s18 = sphi 0, %s30
      %s19 = sphi 0, %s26
      %s20 = sphi 0, %s18
      %s21 = sphi 0, %s19
      %s22 = sphi 0, %s20
      %s23 = sphi 0, %s21
      %s35 = sphi 0, %s37
      %s38 = sphi 0, %s35
      %s39 = sphi 0, %s38
      %s55 = sphi 0, %s39
      %s67 = sphi 0, %s69
      %s70 = sphi 0, %s67
      %s71 = sphi 0, %s70
      %s87 = sphi 0, %s71
      %s101 = sphi 0, %s103
      %s104 = sphi 0, %s101
      %s105 = sphi 0, %s104
      %s121 = sphi 0, %s105
      %s125 = sphi 0, %s125
      %s127 = sphi 0, %s125
      %s128 = sphi 0, %s127
      %s142 = sphi 0, %s128
      %s146 = sphi 0, %s146
      %s148 = sphi 0, %s146
      %s149 = sphi 0, %s148
      %s163 = sphi 0, %s149
      %s171 = sphi 0, %s173
      %s174 = sphi 0, %s171
      %s175 = sphi 0, %s174
      %s191 = sphi 0, %s175
    $region4: #{tpu_custom_call.1} parent=1 // loop_header_branch
      %14 = sbr.rel (%p12) target = $region8
    $region5: #{tpu_custom_call.1} parent=1 // loop_body
      %s16 = ssub.s32 %s11, 1
      %s17 = ssub.s32 %s11, 2
      %s24 = sadd.s32 1, %s19
      %p25 = scmp.ge.s32.totalorder %s24, 2
      %s26 = scalar_select %p25, 0, %s24
      %s27 = sadd.s32 1, %s18
      %s28 = scalar_select %p25, %s27, %s18
      %p29 = scmp.ge.s32.totalorder %s28, 2
      %s30 = scalar_select %p29, 0, %s28
      %s31 = ssub.s32 %s18, %s30
      %s32 = ssub.s32 %s19, %s26
      %s33 = sor.u32 %s31, %s32
      %p34 = scmp.eq.s32.totalorder %s33, 0
      %s36 = sadd.s32 %s35, 1
      %s37 = scalar_select %p34, %s35, %s36
      %p40 = pneg %p34
      %p41 = scmp.eq.s32.totalorder %s11, 3
      %p42 = por %p40, %p41
      %p43 = scmp.ne.s32.totalorder %s35, %s38
      %p44 = scmp.eq.s32.totalorder %s11, 0
      %p45 = por %p43, %p44
      %p46 = scmp.ne.s32.totalorder %s35, %s38
      %p47 = scmp.eq.s32.totalorder %s16, 3
      %p48 = por %p46, %p47
      %p49 = scmp.ne.s32.totalorder %s38, %s39
      %p50 = scmp.eq.s32.totalorder %s16, 0
      %p51 = por %p49, %p50
      %p52 = scmp.ne.s32.totalorder %s38, %s39
      %p53 = scmp.eq.s32.totalorder %s17, 3
      %p54 = por %p52, %p53
      %p56 = scmp.ne.s32.totalorder %s39, %s55
      %p57 = scmp.eq.s32.totalorder %s17, 0
      %p58 = por %p56, %p57
      %s59 = sadd.s32 %s19, 1
      %s60 = smul.u32 %s59, 8
      %s61 = sadd.s32 %s26, 1
      %s62 = smul.u32 %s61, 8
      %s63 = ssub.s32 %s18, %s30
      %s64 = ssub.s32 %s60, %s62
      %s65 = sor.u32 %s63, %s64
      %p66 = scmp.eq.s32.totalorder %s65, 0
      %s68 = sadd.s32 %s67, 1
      %s69 = scalar_select %p66, %s67, %s68
      %p72 = pneg %p66
      %p73 = scmp.eq.s32.totalorder %s11, 3
      %p74 = por %p72, %p73
      %p75 = scmp.ne.s32.totalorder %s67, %s70
      %p76 = scmp.eq.s32.totalorder %s11, 0
      %p77 = por %p75, %p76
      %p78 = scmp.ne.s32.totalorder %s67, %s70
      %p79 = scmp.eq.s32.totalorder %s16, 3
      %p80 = por %p78, %p79
      %p81 = scmp.ne.s32.totalorder %s70, %s71
      %p82 = scmp.eq.s32.totalorder %s16, 0
      %p83 = por %p81, %p82
      %p84 = scmp.ne.s32.totalorder %s70, %s71
      %p85 = scmp.eq.s32.totalorder %s17, 3
      %p86 = por %p84, %p85
      %p88 = scmp.ne.s32.totalorder %s71, %s87
      %p89 = scmp.eq.s32.totalorder %s17, 0
      %p90 = por %p88, %p89
      %s91 = sadd.s32 %s19, 1
      %s92 = smul.u32 %s91, 8
      %s93 = sadd.s32 %s92, 1
      %s94 = sadd.s32 %s26, 1
      %s95 = smul.u32 %s94, 8
      %s96 = sadd.s32 %s95, 1
      %s97 = ssub.s32 %s18, %s30
      %s98 = ssub.s32 %s93, %s96
      %s99 = sor.u32 %s97, %s98
      %p100 = scmp.eq.s32.totalorder %s99, 0
      %s102 = sadd.s32 %s101, 1
      %s103 = scalar_select %p100, %s101, %s102
      %p106 = pneg %p100
      %p107 = scmp.eq.s32.totalorder %s11, 3
      %p108 = por %p106, %p107
      %p109 = scmp.ne.s32.totalorder %s101, %s104
      %p110 = scmp.eq.s32.totalorder %s11, 0
      %p111 = por %p109, %p110
      %p112 = scmp.ne.s32.totalorder %s101, %s104
      %p113 = scmp.eq.s32.totalorder %s16, 3
      %p114 = por %p112, %p113
      %p115 = scmp.ne.s32.totalorder %s104, %s105
      %p116 = scmp.eq.s32.totalorder %s16, 0
      %p117 = por %p115, %p116
      %p118 = scmp.ne.s32.totalorder %s104, %s105
      %p119 = scmp.eq.s32.totalorder %s17, 3
      %p120 = por %p118, %p119
      %p122 = scmp.ne.s32.totalorder %s105, %s121
      %p123 = scmp.eq.s32.totalorder %s17, 0
      %p124 = por %p122, %p123
      %s126 = sadd.s32 %s125, 1
      %p129 = scmp.eq.s32.totalorder %s11, 3
      %p130 = scmp.ne.s32.totalorder %s125, %s127
      %p131 = scmp.eq.s32.totalorder %s11, 0
      %p132 = por %p130, %p131
      %p133 = scmp.ne.s32.totalorder %s125, %s127
      %p134 = scmp.eq.s32.totalorder %s16, 3
      %p135 = por %p133, %p134
      %p136 = scmp.ne.s32.totalorder %s127, %s128
      %p137 = scmp.eq.s32.totalorder %s16, 0
      %p138 = por %p136, %p137
      %p139 = scmp.ne.s32.totalorder %s127, %s128
      %p140 = scmp.eq.s32.totalorder %s17, 3
      %p141 = por %p139, %p140
      %p143 = scmp.ne.s32.totalorder %s128, %s142
      %p144 = scmp.eq.s32.totalorder %s17, 0
      %p145 = por %p143, %p144
      %s147 = sadd.s32 %s146, 1
      %p150 = scmp.eq.s32.totalorder %s11, 3
      %p151 = scmp.ne.s32.totalorder %s146, %s148
      %p152 = scmp.eq.s32.totalorder %s11, 0
      %p153 = por %p151, %p152
      %p154 = scmp.ne.s32.totalorder %s146, %s148
      %p155 = scmp.eq.s32.totalorder %s16, 3
      %p156 = por %p154, %p155
      %p157 = scmp.ne.s32.totalorder %s148, %s149
      %p158 = scmp.eq.s32.totalorder %s16, 0
      %p159 = por %p157, %p158
      %p160 = scmp.ne.s32.totalorder %s148, %s149
      %p161 = scmp.eq.s32.totalorder %s17, 3
      %p162 = por %p160, %p161
      %p164 = scmp.ne.s32.totalorder %s149, %s163
      %p165 = scmp.eq.s32.totalorder %s17, 0
      %p166 = por %p164, %p165
      %s167 = ssub.s32 %s18, %s30
      %s168 = ssub.s32 %s19, %s26
      %s169 = sor.u32 %s167, %s168
      %p170 = scmp.eq.s32.totalorder %s169, 0
      %s172 = sadd.s32 %s171, 1
      %s173 = scalar_select %p170, %s171, %s172
      %p176 = pneg %p170
      %p177 = scmp.eq.s32.totalorder %s11, 3
      %p178 = por %p176, %p177
      %p179 = scmp.ne.s32.totalorder %s171, %s174
      %p180 = scmp.eq.s32.totalorder %s11, 0
      %p181 = por %p179, %p180
      %p182 = scmp.ne.s32.totalorder %s171, %s174
      %p183 = scmp.eq.s32.totalorder %s16, 3
      %p184 = por %p182, %p183
      %p185 = scmp.ne.s32.totalorder %s174, %s175
      %p186 = scmp.eq.s32.totalorder %s16, 0
      %p187 = por %p185, %p186
      %p188 = scmp.ne.s32.totalorder %s174, %s175
      %p189 = scmp.eq.s32.totalorder %s17, 3
      %p190 = por %p188, %p189
      %p192 = scmp.ne.s32.totalorder %s175, %s191
      %p193 = scmp.eq.s32.totalorder %s17, 0
      %p194 = por %p192, %p193
      %p195 = scmp.le.s32.totalorder 1, %s11
      %p196 = scmp.lt.s32.totalorder %s11, 5
      %p197 = pnand %p195, %p196
      %p198 = pneg %p197
      // Predicated region
      $region9: #{tpu_custom_call.1} parent=5 // pred_check
        _
      $region10: #{tpu_custom_call.1} parent=5 // pred_check_branch
        %200 = sbr.rel (%p197) target = $region12
      $region11: #{tpu_custom_call.1} parent=5 // pred_region
        %s201 = ssub.s32 %s11, 1
        // Predicated region
        $region13: #{tpu_custom_call.1} parent=11 // pred_check
          %p202 = pneg %p138
        $region14: #{tpu_custom_call.1} parent=11 // pred_check_branch
          %204 = sbr.rel (%p202) target = $region16
        $region15: #{tpu_custom_call.1} parent=11 // pred_region
          _
        $region16: #{tpu_custom_call.1} parent=11 // pred_fallthru
          _
        // Predicated region
        $region17: #{tpu_custom_call.1} parent=11 // pred_check
          %p205 = pneg %p159
        $region18: #{tpu_custom_call.1} parent=11 // pred_check_branch
          %207 = sbr.rel (%p205) target = $region20
        $region19: #{tpu_custom_call.1} parent=11 // pred_region
          _
        $region20: #{tpu_custom_call.1} parent=11 // pred_fallthru
          _
      $region12: #{tpu_custom_call.1} parent=5 // pred_fallthru
        _
      %p208 = scmp.lt.s32.totalorder %s11, 4
      // Predicated region
      $region21: #{tpu_custom_call.1} parent=5 // pred_check
        %p209 = pneg %p208
      $region22: #{tpu_custom_call.1} parent=5 // pred_check_branch
        %211 = sbr.rel (%p209) target = $region24
      $region23: #{tpu_custom_call.1} parent=5 // pred_region
        // Predicated region
        $region25: #{tpu_custom_call.1} parent=23 // pred_check
          %p212 = pneg %p45
        $region26: #{tpu_custom_call.1} parent=23 // pred_check_branch
          %214 = sbr.rel (%p212) target = $region28
        $region27: #{tpu_custom_call.1} parent=23 // pred_region
          %s215 = smul.u32 8, %s19
          %s216 = ssub.s32 18, %s215
          %p217 = scmp.lt.s32.totalorder %s216, 8
          %s218 = scalar_select %p217, %s216, 8
          %s219 = smul.u32 8, %s218
          %s220 = smul.u32 %s219, 3
          %p221 = scmp.lt.s32.totalorder %s18, 1
          %s222 = scalar_select %p221, %s18, 1
          %p223 = scmp.lt.s32.totalorder %s215, 17
          %s224 = scalar_select %p223, %s215, 17
          %s225 = smul.addr %s224, 3
          %s226 = smul.addr %s222, 54
          %s227 = sadd.s32 %s225, %s226
          %s228 = smul.addr %s227, 8
          %s229 = scalar_lea.vmem %s0, %s228
          %s230 = smul.u32 8, %s19
          %s231 = ssub.s32 18, %s230
          %p232 = scmp.lt.s32.totalorder %s231, 8
          %s233 = scalar_select %p232, %s231, 8
          %s234 = smul.u32 8, %s233
          %s235 = smul.u32 %s234, 3
        $region28: #{tpu_custom_call.1} parent=23 // pred_fallthru
          _
        // Predicated region
        $region29: #{tpu_custom_call.1} parent=23 // pred_check
          %p236 = pneg %p77
        $region30: #{tpu_custom_call.1} parent=23 // pred_check_branch
          %238 = sbr.rel (%p236) target = $region32
        $region31: #{tpu_custom_call.1} parent=23 // pred_region
          %s239 = sadd.s32 %s19, 1
          %s240 = smul.u32 %s239, 8
          %p241 = scmp.lt.s32.totalorder %s18, 1
          %s242 = scalar_select %p241, %s18, 1
          %p243 = scmp.lt.s32.totalorder %s240, 17
          %s244 = scalar_select %p243, %s240, 17
          %s245 = smul.addr %s244, 3
          %s246 = smul.addr %s242, 54
          %s247 = sadd.s32 %s245, %s246
          %s248 = smul.addr %s247, 8
          %s249 = scalar_lea.vmem %s1, %s248
          %s250 = sadd.s32 %s19, 1
          %s251 = smul.u32 %s250, 8
        $region32: #{tpu_custom_call.1} parent=23 // pred_fallthru
          _
        // Predicated region
        $region33: #{tpu_custom_call.1} parent=23 // pred_check
          %p252 = pneg %p111
        $region34: #{tpu_custom_call.1} parent=23 // pred_check_branch
          %254 = sbr.rel (%p252) target = $region36
        $region35: #{tpu_custom_call.1} parent=23 // pred_region
          %s255 = sadd.s32 %s19, 1
          %s256 = smul.u32 %s255, 8
          %s257 = sadd.s32 %s256, 1
          %p258 = scmp.lt.s32.totalorder %s18, 1
          %s259 = scalar_select %p258, %s18, 1
          %p260 = scmp.lt.s32.totalorder %s257, 17
          %s261 = scalar_select %p260, %s257, 17
          %s262 = smul.addr %s261, 3
          %s263 = smul.addr %s259, 54
          %s264 = sadd.s32 %s262, %s263
          %s265 = smul.addr %s264, 8
          %s266 = scalar_lea.vmem %s2, %s265
          %s267 = sadd.s32 %s19, 1
          %s268 = smul.u32 %s267, 8
          %s269 = sadd.s32 %s268, 1
        $region36: #{tpu_custom_call.1} parent=23 // pred_fallthru
          _
      $region24: #{tpu_custom_call.1} parent=5 // pred_fallthru
        _
      %p270 = scmp.le.s32.totalorder 1, %s11
      %p271 = scmp.lt.s32.totalorder %s11, 5
      %p272 = pnand %p270, %p271
      %p273 = pneg %p272
      // Predicated region
      $region37: #{tpu_custom_call.1} parent=5 // pred_check
        _
      $region38: #{tpu_custom_call.1} parent=5 // pred_check_branch
        %275 = sbr.rel (%p272) target = $region40
      $region39: #{tpu_custom_call.1} parent=5 // pred_region
        %s276 = ssub.s32 %s11, 1
        %s277 = smul.u32 8, %s21
        %s278 = ssub.s32 18, %s277
        %p279 = scmp.lt.s32.totalorder %s278, 8
        %s280 = scalar_select %p279, %s278, 8
        %s281 = smul.u32 8, %s280
        %s282 = smul.u32 %s281, 3
        %p283 = scmp.lt.s32.totalorder %s20, 1
        %s284 = scalar_select %p283, %s20, 1
        %p285 = scmp.lt.s32.totalorder %s277, 17
        %s286 = scalar_select %p285, %s277, 17
        %s287 = smul.addr %s286, 3
        %s288 = smul.addr %s284, 54
        %s289 = sadd.s32 %s287, %s288
        %s290 = smul.addr %s289, 8
        %s291 = scalar_lea.vmem %s0, %s290
        %p292 = pneg %p51
        %p293 = pneg %p48
        %s294 = sadd.s32 %s21, 1
        %s295 = smul.u32 %s294, 8
        %p296 = scmp.lt.s32.totalorder %s20, 1
        %s297 = scalar_select %p296, %s20, 1
        %p298 = scmp.lt.s32.totalorder %s295, 17
        %s299 = scalar_select %p298, %s295, 17
        %s300 = smul.addr %s299, 3
        %s301 = smul.addr %s297, 54
        %s302 = sadd.s32 %s300, %s301
        %s303 = smul.addr %s302, 8
        %s304 = scalar_lea.vmem %s1, %s303
        %p305 = pneg %p83
        %p306 = pneg %p80
        %s307 = sadd.s32 %s21, 1
        %s308 = smul.u32 %s307, 8
        %s309 = sadd.s32 %s308, 1
        %p310 = scmp.lt.s32.totalorder %s20, 1
        %s311 = scalar_select %p310, %s20, 1
        %p312 = scmp.lt.s32.totalorder %s309, 17
        %s313 = scalar_select %p312, %s309, 17
        %s314 = smul.addr %s313, 3
        %s315 = smul.addr %s311, 54
        %s316 = sadd.s32 %s314, %s315
        %s317 = smul.addr %s316, 8
        %s318 = scalar_lea.vmem %s2, %s317
        %p319 = pneg %p117
        %p320 = pneg %p114
        %p321 = pneg %p138
        %p322 = pneg %p135
        %p323 = pneg %p159
        %p324 = pneg %p156
        %p325 = pneg %p187
        %p326 = pneg %p184
        %s327 = sand.u32 %s174, 1
        %s328 = sand.u32 %s174, 1
        %s329 = smul.addr %s328, 512
        %s330 = scalar_lea.vmem [#allocation2], %s329
        %s331 = smul.u32 8, %s21
        %s332 = ssub.s32 18, %s331
        %p333 = scmp.lt.s32.totalorder %s332, 8
        %s334 = scalar_select %p333, %s332, 8
        %s335 = smul.u32 8, %s334
        %s336 = smul.u32 %s335, 3
        %p337 = scmp.lt.s32.totalorder %s20, 1
        %s338 = scalar_select %p337, %s20, 1
        %p339 = scmp.lt.s32.totalorder %s331, 17
        %s340 = scalar_select %p339, %s331, 17
        %s341 = smul.addr %s340, 3
        %s342 = smul.addr %s338, 54
        %s343 = sadd.s32 %s341, %s342
        %s344 = smul.addr %s343, 8
        %s345 = scalar_lea.vmem %s0, %s344
        %s346 = smul.u32 8, %s21
        %s347 = ssub.s32 18, %s346
        %p348 = scmp.lt.s32.totalorder %s347, 8
        %s349 = scalar_select %p348, %s347, 8
        %s350 = smul.u32 8, %s349
        %s351 = smul.u32 %s350, 3
        %s352 = sadd.s32 %s21, 1
        %s353 = smul.u32 %s352, 8
        %p354 = scmp.lt.s32.totalorder %s20, 1
        %s355 = scalar_select %p354, %s20, 1
        %p356 = scmp.lt.s32.totalorder %s353, 17
        %s357 = scalar_select %p356, %s353, 17
        %s358 = smul.addr %s357, 3
        %s359 = smul.addr %s355, 54
        %s360 = sadd.s32 %s358, %s359
        %s361 = smul.addr %s360, 8
        %s362 = scalar_lea.vmem %s1, %s361
        %s363 = sadd.s32 %s21, 1
        %s364 = smul.u32 %s363, 8
        %s365 = sadd.s32 %s21, 1
        %s366 = smul.u32 %s365, 8
        %s367 = sadd.s32 %s366, 1
        %p368 = scmp.lt.s32.totalorder %s20, 1
        %s369 = scalar_select %p368, %s20, 1
        %p370 = scmp.lt.s32.totalorder %s367, 17
        %s371 = scalar_select %p370, %s367, 17
        %s372 = smul.addr %s371, 3
        %s373 = smul.addr %s369, 54
        %s374 = sadd.s32 %s372, %s373
        %s375 = smul.addr %s374, 8
        %s376 = scalar_lea.vmem %s2, %s375
        %s377 = sadd.s32 %s21, 1
        %s378 = smul.u32 %s377, 8
        %s379 = sadd.s32 %s378, 1
        %s380 = smul.u32 8, %s21
        %v381 = vld [vmem:[%s345] sm:$0xff]
        %v382 = vld [vmem:[%s345 + $0x8] sm:$0xff]
        %v383 = vld [vmem:[%s345 + $0x10] sm:$0x3]
        %v384 = vld [vmem:[%s345 + $0x18] sm:$0xff]
        %v385 = vld [vmem:[%s345 + $0x20] sm:$0xff]
        %v386 = vld [vmem:[%s345 + $0x28] sm:$0x3]
        %v387 = vld [vmem:[%s345 + $0x30] sm:$0xff]
        %v388 = vld [vmem:[%s345 + $0x38] sm:$0xff]
        %v389 = vld [vmem:[%s345 + $0x40] sm:$0x3]
        %v390 = vld [vmem:[%s345 + $0x48] sm:$0xff]
        %v391 = vld [vmem:[%s345 + $0x50] sm:$0xff]
        %v392 = vld [vmem:[%s345 + $0x58] sm:$0x3]
        %v393 = vld [vmem:[%s345 + $0x60] sm:$0xff]
        %v394 = vld [vmem:[%s345 + $0x68] sm:$0xff]
        %v395 = vld [vmem:[%s345 + $0x70] sm:$0x3]
        %v396 = vld [vmem:[%s345 + $0x78] sm:$0xff]
        %v397 = vld [vmem:[%s345 + $0x80] sm:$0xff]
        %v398 = vld [vmem:[%s345 + $0x88] sm:$0x3]
        %v399 = vld [vmem:[%s345 + $0x90] sm:$0xff]
        %v400 = vld [vmem:[%s345 + $0x98] sm:$0xff]
        %v401 = vld [vmem:[%s345 + $0xa0] sm:$0x3]
        %v402 = vld [vmem:[%s345 + $0xa8] sm:$0xff]
        %v403 = vld [vmem:[%s345 + $0xb0] sm:$0xff]
        %v404 = vld [vmem:[%s345 + $0xb8] sm:$0x3]
        %v405 = vld [vmem:[%s362] sm:$0xff]
        %v406 = vld [vmem:[%s362 + $0x8] sm:$0xff]
        %v407 = vld [vmem:[%s362 + $0x10] sm:$0x3]
        %v408 = vld [vmem:[%s376] sm:$0xff]
        %v409 = vld [vmem:[%s376 + $0x8] sm:$0xff]
        %v410 = vld [vmem:[%s376 + $0x10] sm:$0x3]
        %v411 = vld [vmem:[%s4] sm:$0x1]
        %v413 = vperm.slane %v411, 0
        %v415 = vld [vmem:[%s3] sm:$0xf]
        %vm416 = vcmask 31744
        %v418 = vsel %vm416, %v381, 0
        %v421 = vsel %vm416, %v382, 0
        %v424 = vsel %vm416, %v384, 0
        %v427 = vsel %vm416, %v385, 0
        %v430 = vsel %vm416, %v387, 0
        %v433 = vsel %vm416, %v388, 0
        %v436 = vsel %vm416, %v390, 0
        %v439 = vsel %vm416, %v391, 0
        %v442 = vsel %vm416, %v393, 0
        %v445 = vsel %vm416, %v394, 0
        %v448 = vsel %vm416, %v396, 0
        %v451 = vsel %vm416, %v397, 0
        %v454 = vsel %vm416, %v399, 0
        %v457 = vsel %vm416, %v400, 0
        %v460 = vsel %vm416, %v402, 0
        %v463 = vsel %vm416, %v403, 0
        %vm465 = vcmask 1043456
        %v467 = vsel %vm465, %v415, 0
        %469 = vmatpush.msra.mxu0 0.0
        %470 = vmatpush.msra.mxu0 0.0
        %471 = vmatpush.msra.mxu0 0.0
        %472 = vmatpush.msra.mxu0 0.0
        %473 = vmatpush.msra.mxu0 0.0
        %474 = vmatpush.msra.mxu0 0.0
        %475 = vmatpush.msra.mxu0 0.0
        %476 = vmatpush.msra.mxu0 0.0
        %477 = vmatpush.msra.mxu0 0.0
        %478 = vmatpush.msra.mxu0 0.0
        %479 = vmatpush.msra.mxu0 0.0
        %480 = vmatpush.msra.mxu0 0.0
        %481 = vmatpush.msra.mxu0 0.0
        %482 = vmatpush.msra.mxu0 0.0
        %483 = vmatpush.msra.mxu0 0.0
        %484 = vmatpush.msra.mxu0 %v467
        %485 = vmatmul.f32.gmra.mxu0 %v418
        %v486 = vpop.f32.mrf.mxu0
        %v487 = vadd.f32 0.0, %v486
        %488 = vmatmul.f32.gmra.mxu0 %v421
        %v489 = vpop.f32.mrf.mxu0
        %v490 = vadd.f32 0.0, %v489
        %491 = vmatmul.f32.gmra.mxu0 %v424
        %v492 = vpop.f32.mrf.mxu0
        %v493 = vadd.f32 0.0, %v492
        %494 = vmatmul.f32.gmra.mxu0 %v427
        %v495 = vpop.f32.mrf.mxu0
        %v496 = vadd.f32 0.0, %v495
        %497 = vmatmul.f32.gmra.mxu0 %v430
        %v498 = vpop.f32.mrf.mxu0
        %v499 = vadd.f32 0.0, %v498
        %500 = vmatmul.f32.gmra.mxu0 %v433
        %v501 = vpop.f32.mrf.mxu0
        %v502 = vadd.f32 0.0, %v501
        %503 = vmatmul.f32.gmra.mxu0 %v436
        %v504 = vpop.f32.mrf.mxu0
        %v505 = vadd.f32 0.0, %v504
        %506 = vmatmul.f32.gmra.mxu0 %v439
        %v507 = vpop.f32.mrf.mxu0
        %v508 = vadd.f32 0.0, %v507
        %509 = vmatmul.f32.gmra.mxu0 %v442
        %v510 = vpop.f32.mrf.mxu0
        %v511 = vadd.f32 0.0, %v510
        %512 = vmatmul.f32.gmra.mxu0 %v445
        %v513 = vpop.f32.mrf.mxu0
        %v514 = vadd.f32 0.0, %v513
        %515 = vmatmul.f32.gmra.mxu0 %v448
        %v516 = vpop.f32.mrf.mxu0
        %v517 = vadd.f32 0.0, %v516
        %518 = vmatmul.f32.gmra.mxu0 %v451
        %v519 = vpop.f32.mrf.mxu0
        %v520 = vadd.f32 0.0, %v519
        %521 = vmatmul.f32.gmra.mxu0 %v454
        %v522 = vpop.f32.mrf.mxu0
        %v523 = vadd.f32 0.0, %v522
        %524 = vmatmul.f32.gmra.mxu0 %v457
        %v525 = vpop.f32.mrf.mxu0
        %v526 = vadd.f32 0.0, %v525
        %527 = vmatmul.f32.gmra.mxu0 %v460
        %v528 = vpop.f32.mrf.mxu0
        %v529 = vadd.f32 0.0, %v528
        %530 = vmatmul.f32.gmra.mxu0 %v463
        %v531 = vpop.f32.mrf.mxu0
        %v532 = vadd.f32 0.0, %v531
        %533 = vdwg.mxu0
        %v534 = vadd.f32 %v413, %v487
        %v535 = vadd.f32 %v413, %v490
        %v536 = vadd.f32 %v413, %v493
        %v537 = vadd.f32 %v413, %v496
        %v538 = vadd.f32 %v413, %v499
        %v539 = vadd.f32 %v413, %v502
        %v540 = vadd.f32 %v413, %v505
        %v541 = vadd.f32 %v413, %v508
        %v542 = vadd.f32 %v413, %v511
        %v543 = vadd.f32 %v413, %v514
        %v544 = vadd.f32 %v413, %v517
        %v545 = vadd.f32 %v413, %v520
        %v546 = vadd.f32 %v413, %v523
        %v547 = vadd.f32 %v413, %v526
        %v548 = vadd.f32 %v413, %v529
        %v549 = vadd.f32 %v413, %v532
        %vm558 = vcmask 1046528
        %v559 = vrot.slane %v381, 1
        %v560 = vrot.slane %v382, 1
        %v561 = vsel %vm558, %v559, %v560
        %v562 = vrot.slane %v383, 1
        %v563 = vsel %vm558, %v560, %v562
        %v564 = vrot.slane %v384, 1
        %v565 = vrot.slane %v385, 1
        %v566 = vsel %vm558, %v564, %v565
        %v567 = vrot.slane %v386, 1
        %v568 = vsel %vm558, %v565, %v567
        %v569 = vrot.slane %v387, 1
        %v570 = vrot.slane %v388, 1
        %v571 = vsel %vm558, %v569, %v570
        %v572 = vrot.slane %v389, 1
        %v573 = vsel %vm558, %v570, %v572
        %v574 = vrot.slane %v390, 1
        %v575 = vrot.slane %v391, 1
        %v576 = vsel %vm558, %v574, %v575
        %v577 = vrot.slane %v392, 1
        %v578 = vsel %vm558, %v575, %v577
        %v579 = vrot.slane %v393, 1
        %v580 = vrot.slane %v394, 1
        %v581 = vsel %vm558, %v579, %v580
        %v582 = vrot.slane %v395, 1
        %v583 = vsel %vm558, %v580, %v582
        %v584 = vrot.slane %v396, 1
        %v585 = vrot.slane %v397, 1
        %v586 = vsel %vm558, %v584, %v585
        %v587 = vrot.slane %v398, 1
        %v588 = vsel %vm558, %v585, %v587
        %v589 = vrot.slane %v399, 1
        %v590 = vrot.slane %v400, 1
        %v591 = vsel %vm558, %v589, %v590
        %v592 = vrot.slane %v401, 1
        %v593 = vsel %vm558, %v590, %v592
        %v594 = vrot.slane %v402, 1
        %v595 = vrot.slane %v403, 1
        %v596 = vsel %vm558, %v594, %v595
        %v597 = vrot.slane %v404, 1
        %v598 = vsel %vm558, %v595, %v597
        %s599 = scalar_lea.vmem %s3, 4
        %v600 = vld [vmem:[%s599] sm:$0xf]
        %v601 = vsel %vm416, %v561, 0
        %v603 = vsel %vm416, %v563, 0
        %v605 = vsel %vm416, %v566, 0
        %v607 = vsel %vm416, %v568, 0
        %v609 = vsel %vm416, %v571, 0
        %v611 = vsel %vm416, %v573, 0
        %v613 = vsel %vm416, %v576, 0
        %v615 = vsel %vm416, %v578, 0
        %v617 = vsel %vm416, %v581, 0
        %v619 = vsel %vm416, %v583, 0
        %v621 = vsel %vm416, %v586, 0
        %v623 = vsel %vm416, %v588, 0
        %v625 = vsel %vm416, %v591, 0
        %v627 = vsel %vm416, %v593, 0
        %v629 = vsel %vm416, %v596, 0
        %v631 = vsel %vm416, %v598, 0
        %v634 = vsel %vm465, %v600, 0
        %636 = vmatpush.msra.mxu0 0.0
        %637 = vmatpush.msra.mxu0 0.0
        %638 = vmatpush.msra.mxu0 0.0
        %639 = vmatpush.msra.mxu0 0.0
        %640 = vmatpush.msra.mxu0 0.0
        %641 = vmatpush.msra.mxu0 0.0
        %642 = vmatpush.msra.mxu0 0.0
        %643 = vmatpush.msra.mxu0 0.0
        %644 = vmatpush.msra.mxu0 0.0
        %645 = vmatpush.msra.mxu0 0.0
        %646 = vmatpush.msra.mxu0 0.0
        %647 = vmatpush.msra.mxu0 0.0
        %648 = vmatpush.msra.mxu0 0.0
        %649 = vmatpush.msra.mxu0 0.0
        %650 = vmatpush.msra.mxu0 0.0
        %651 = vmatpush.msra.mxu0 %v634
        %652 = vmatmul.f32.gmra.mxu0 %v601
        %v653 = vpop.f32.mrf.mxu0
        %v654 = vadd.f32 0.0, %v653
        %655 = vmatmul.f32.gmra.mxu0 %v603
        %v656 = vpop.f32.mrf.mxu0
        %v657 = vadd.f32 0.0, %v656
        %658 = vmatmul.f32.gmra.mxu0 %v605
        %v659 = vpop.f32.mrf.mxu0
        %v660 = vadd.f32 0.0, %v659
        %661 = vmatmul.f32.gmra.mxu0 %v607
        %v662 = vpop.f32.mrf.mxu0
        %v663 = vadd.f32 0.0, %v662
        %664 = vmatmul.f32.gmra.mxu0 %v609
        %v665 = vpop.f32.mrf.mxu0
        %v666 = vadd.f32 0.0, %v665
        %667 = vmatmul.f32.gmra.mxu0 %v611
        %v668 = vpop.f32.mrf.mxu0
        %v669 = vadd.f32 0.0, %v668
        %670 = vmatmul.f32.gmra.mxu0 %v613
        %v671 = vpop.f32.mrf.mxu0
        %v672 = vadd.f32 0.0, %v671
        %673 = vmatmul.f32.gmra.mxu0 %v615
        %v674 = vpop.f32.mrf.mxu0
        %v675 = vadd.f32 0.0, %v674
        %676 = vmatmul.f32.gmra.mxu0 %v617
        %v677 = vpop.f32.mrf.mxu0
        %v678 = vadd.f32 0.0, %v677
        %679 = vmatmul.f32.gmra.mxu0 %v619
        %v680 = vpop.f32.mrf.mxu0
        %v681 = vadd.f32 0.0, %v680
        %682 = vmatmul.f32.gmra.mxu0 %v621
        %v683 = vpop.f32.mrf.mxu0
        %v684 = vadd.f32 0.0, %v683
        %685 = vmatmul.f32.gmra.mxu0 %v623
        %v686 = vpop.f32.mrf.mxu0
        %v687 = vadd.f32 0.0, %v686
        %688 = vmatmul.f32.gmra.mxu0 %v625
        %v689 = vpop.f32.mrf.mxu0
        %v690 = vadd.f32 0.0, %v689
        %691 = vmatmul.f32.gmra.mxu0 %v627
        %v692 = vpop.f32.mrf.mxu0
        %v693 = vadd.f32 0.0, %v692
        %694 = vmatmul.f32.gmra.mxu0 %v629
        %v695 = vpop.f32.mrf.mxu0
        %v696 = vadd.f32 0.0, %v695
        %697 = vmatmul.f32.gmra.mxu0 %v631
        %v698 = vpop.f32.mrf.mxu0
        %v699 = vadd.f32 0.0, %v698
        %700 = vdwg.mxu0
        %v701 = vadd.f32 %v534, %v654
        %v702 = vadd.f32 %v535, %v657
        %v703 = vadd.f32 %v536, %v660
        %v704 = vadd.f32 %v537, %v663
        %v705 = vadd.f32 %v538, %v666
        %v706 = vadd.f32 %v539, %v669
        %v707 = vadd.f32 %v540, %v672
        %v708 = vadd.f32 %v541, %v675
        %v709 = vadd.f32 %v542, %v678
        %v710 = vadd.f32 %v543, %v681
        %v711 = vadd.f32 %v544, %v684
        %v712 = vadd.f32 %v545, %v687
        %v713 = vadd.f32 %v546, %v690
        %v714 = vadd.f32 %v547, %v693
        %v715 = vadd.f32 %v548, %v696
        %v716 = vadd.f32 %v549, %v699
        %s717 = scalar_lea.vmem %s3, 8
        %v718 = vld [vmem:[%s717] sm:$0xf]
        %v720 = vsel %vm416, %v405, 0
        %v723 = vsel %vm416, %v406, 0
        %v726 = vsel %vm465, %v718, 0
        %728 = vmatpush.msra.mxu0 0.0
        %729 = vmatpush.msra.mxu0 0.0
        %730 = vmatpush.msra.mxu0 0.0
        %731 = vmatpush.msra.mxu0 0.0
        %732 = vmatpush.msra.mxu0 0.0
        %733 = vmatpush.msra.mxu0 0.0
        %734 = vmatpush.msra.mxu0 0.0
        %735 = vmatpush.msra.mxu0 0.0
        %736 = vmatpush.msra.mxu0 0.0
        %737 = vmatpush.msra.mxu0 0.0
        %738 = vmatpush.msra.mxu0 0.0
        %739 = vmatpush.msra.mxu0 0.0
        %740 = vmatpush.msra.mxu0 0.0
        %741 = vmatpush.msra.mxu0 0.0
        %742 = vmatpush.msra.mxu0 0.0
        %743 = vmatpush.msra.mxu0 %v726
        %744 = vmatmul.f32.gmra.mxu0 %v424
        %v745 = vpop.f32.mrf.mxu0
        %v746 = vadd.f32 0.0, %v745
        %747 = vmatmul.f32.gmra.mxu0 %v427
        %v748 = vpop.f32.mrf.mxu0
        %v749 = vadd.f32 0.0, %v748
        %750 = vmatmul.f32.gmra.mxu0 %v430
        %v751 = vpop.f32.mrf.mxu0
        %v752 = vadd.f32 0.0, %v751
        %753 = vmatmul.f32.gmra.mxu0 %v433
        %v754 = vpop.f32.mrf.mxu0
        %v755 = vadd.f32 0.0, %v754
        %756 = vmatmul.f32.gmra.mxu0 %v436
        %v757 = vpop.f32.mrf.mxu0
        %v758 = vadd.f32 0.0, %v757
        %759 = vmatmul.f32.gmra.mxu0 %v439
        %v760 = vpop.f32.mrf.mxu0
        %v761 = vadd.f32 0.0, %v760
        %762 = vmatmul.f32.gmra.mxu0 %v442
        %v763 = vpop.f32.mrf.mxu0
        %v764 = vadd.f32 0.0, %v763
        %765 = vmatmul.f32.gmra.mxu0 %v445
        %v766 = vpop.f32.mrf.mxu0
        %v767 = vadd.f32 0.0, %v766
        %768 = vmatmul.f32.gmra.mxu0 %v448
        %v769 = vpop.f32.mrf.mxu0
        %v770 = vadd.f32 0.0, %v769
        %771 = vmatmul.f32.gmra.mxu0 %v451
        %v772 = vpop.f32.mrf.mxu0
        %v773 = vadd.f32 0.0, %v772
        %774 = vmatmul.f32.gmra.mxu0 %v454
        %v775 = vpop.f32.mrf.mxu0
        %v776 = vadd.f32 0.0, %v775
        %777 = vmatmul.f32.gmra.mxu0 %v457
        %v778 = vpop.f32.mrf.mxu0
        %v779 = vadd.f32 0.0, %v778
        %780 = vmatmul.f32.gmra.mxu0 %v460
        %v781 = vpop.f32.mrf.mxu0
        %v782 = vadd.f32 0.0, %v781
        %783 = vmatmul.f32.gmra.mxu0 %v463
        %v784 = vpop.f32.mrf.mxu0
        %v785 = vadd.f32 0.0, %v784
        %786 = vmatmul.f32.gmra.mxu0 %v720
        %v787 = vpop.f32.mrf.mxu0
        %v788 = vadd.f32 0.0, %v787
        %789 = vmatmul.f32.gmra.mxu0 %v723
        %v790 = vpop.f32.mrf.mxu0
        %v791 = vadd.f32 0.0, %v790
        %792 = vdwg.mxu0
        %v793 = vadd.f32 %v701, %v746
        %v794 = vadd.f32 %v702, %v749
        %v795 = vadd.f32 %v703, %v752
        %v796 = vadd.f32 %v704, %v755
        %v797 = vadd.f32 %v705, %v758
        %v798 = vadd.f32 %v706, %v761
        %v799 = vadd.f32 %v707, %v764
        %v800 = vadd.f32 %v708, %v767
        %v801 = vadd.f32 %v709, %v770
        %v802 = vadd.f32 %v710, %v773
        %v803 = vadd.f32 %v711, %v776
        %v804 = vadd.f32 %v712, %v779
        %v805 = vadd.f32 %v713, %v782
        %v806 = vadd.f32 %v714, %v785
        %v807 = vadd.f32 %v715, %v788
        %v808 = vadd.f32 %v716, %v791
        %v810 = vrot.slane %v405, 1
        %v811 = vrot.slane %v406, 1
        %v812 = vsel %vm558, %v810, %v811
        %v813 = vrot.slane %v407, 1
        %v814 = vsel %vm558, %v811, %v813
        %s815 = scalar_lea.vmem %s3, 12
        %v816 = vld [vmem:[%s815] sm:$0xf]
        %v817 = vsel %vm416, %v812, 0
        %v819 = vsel %vm416, %v814, 0
        %v822 = vsel %vm465, %v816, 0
        %824 = vmatpush.msra.mxu0 0.0
        %825 = vmatpush.msra.mxu0 0.0
        %826 = vmatpush.msra.mxu0 0.0
        %827 = vmatpush.msra.mxu0 0.0
        %828 = vmatpush.msra.mxu0 0.0
        %829 = vmatpush.msra.mxu0 0.0
        %830 = vmatpush.msra.mxu0 0.0
        %831 = vmatpush.msra.mxu0 0.0
        %832 = vmatpush.msra.mxu0 0.0
        %833 = vmatpush.msra.mxu0 0.0
        %834 = vmatpush.msra.mxu0 0.0
        %835 = vmatpush.msra.mxu0 0.0
        %836 = vmatpush.msra.mxu0 0.0
        %837 = vmatpush.msra.mxu0 0.0
        %838 = vmatpush.msra.mxu0 0.0
        %839 = vmatpush.msra.mxu0 %v822
        %840 = vmatmul.f32.gmra.mxu0 %v605
        %v841 = vpop.f32.mrf.mxu0
        %v842 = vadd.f32 0.0, %v841
        %843 = vmatmul.f32.gmra.mxu0 %v607
        %v844 = vpop.f32.mrf.mxu0
        %v845 = vadd.f32 0.0, %v844
        %846 = vmatmul.f32.gmra.mxu0 %v609
        %v847 = vpop.f32.mrf.mxu0
        %v848 = vadd.f32 0.0, %v847
        %849 = vmatmul.f32.gmra.mxu0 %v611
        %v850 = vpop.f32.mrf.mxu0
        %v851 = vadd.f32 0.0, %v850
        %852 = vmatmul.f32.gmra.mxu0 %v613
        %v853 = vpop.f32.mrf.mxu0
        %v854 = vadd.f32 0.0, %v853
        %855 = vmatmul.f32.gmra.mxu0 %v615
        %v856 = vpop.f32.mrf.mxu0
        %v857 = vadd.f32 0.0, %v856
        %858 = vmatmul.f32.gmra.mxu0 %v617
        %v859 = vpop.f32.mrf.mxu0
        %v860 = vadd.f32 0.0, %v859
        %861 = vmatmul.f32.gmra.mxu0 %v619
        %v862 = vpop.f32.mrf.mxu0
        %v863 = vadd.f32 0.0, %v862
        %864 = vmatmul.f32.gmra.mxu0 %v621
        %v865 = vpop.f32.mrf.mxu0
        %v866 = vadd.f32 0.0, %v865
        %867 = vmatmul.f32.gmra.mxu0 %v623
        %v868 = vpop.f32.mrf.mxu0
        %v869 = vadd.f32 0.0, %v868
        %870 = vmatmul.f32.gmra.mxu0 %v625
        %v871 = vpop.f32.mrf.mxu0
        %v872 = vadd.f32 0.0, %v871
        %873 = vmatmul.f32.gmra.mxu0 %v627
        %v874 = vpop.f32.mrf.mxu0
        %v875 = vadd.f32 0.0, %v874
        %876 = vmatmul.f32.gmra.mxu0 %v629
        %v877 = vpop.f32.mrf.mxu0
        %v878 = vadd.f32 0.0, %v877
        %879 = vmatmul.f32.gmra.mxu0 %v631
        %v880 = vpop.f32.mrf.mxu0
        %v881 = vadd.f32 0.0, %v880
        %882 = vmatmul.f32.gmra.mxu0 %v817
        %v883 = vpop.f32.mrf.mxu0
        %v884 = vadd.f32 0.0, %v883
        %885 = vmatmul.f32.gmra.mxu0 %v819
        %v886 = vpop.f32.mrf.mxu0
        %v887 = vadd.f32 0.0, %v886
        %888 = vdwg.mxu0
        %v889 = vadd.f32 %v793, %v842
        %v890 = vadd.f32 %v794, %v845
        %v891 = vadd.f32 %v795, %v848
        %v892 = vadd.f32 %v796, %v851
        %v893 = vadd.f32 %v797, %v854
        %v894 = vadd.f32 %v798, %v857
        %v895 = vadd.f32 %v799, %v860
        %v896 = vadd.f32 %v800, %v863
        %v897 = vadd.f32 %v801, %v866
        %v898 = vadd.f32 %v802, %v869
        %v899 = vadd.f32 %v803, %v872
        %v900 = vadd.f32 %v804, %v875
        %v901 = vadd.f32 %v805, %v878
        %v902 = vadd.f32 %v806, %v881
        %v903 = vadd.f32 %v807, %v884
        %v904 = vadd.f32 %v808, %v887
        %905 = vst.msk [vmem:[%s330] sm:$0xff] %vm416, %v889
        %906 = vst.msk [vmem:[%s330 + $0x8] sm:$0xff] %vm416, %v890
        %907 = vst.msk [vmem:[%s330 + $0x10] sm:$0xff] %vm416, %v891
        %908 = vst.msk [vmem:[%s330 + $0x18] sm:$0xff] %vm416, %v892
        %909 = vst.msk [vmem:[%s330 + $0x20] sm:$0xff] %vm416, %v893
        %910 = vst.msk [vmem:[%s330 + $0x28] sm:$0xff] %vm416, %v894
        %911 = vst.msk [vmem:[%s330 + $0x30] sm:$0xff] %vm416, %v895
        %912 = vst.msk [vmem:[%s330 + $0x38] sm:$0xff] %vm416, %v896
        %913 = vst.msk [vmem:[%s330 + $0x40] sm:$0xff] %vm416, %v897
        %914 = vst.msk [vmem:[%s330 + $0x48] sm:$0xff] %vm416, %v898
        %915 = vst.msk [vmem:[%s330 + $0x50] sm:$0xff] %vm416, %v899
        %916 = vst.msk [vmem:[%s330 + $0x58] sm:$0xff] %vm416, %v900
        %917 = vst.msk [vmem:[%s330 + $0x60] sm:$0xff] %vm416, %v901
        %918 = vst.msk [vmem:[%s330 + $0x68] sm:$0xff] %vm416, %v902
        %919 = vst.msk [vmem:[%s330 + $0x70] sm:$0xff] %vm416, %v903
        %920 = vst.msk [vmem:[%s330 + $0x78] sm:$0xff] %vm416, %v904
        %s921 = scalar_lea.vmem %s3, 16
        %v922 = vld [vmem:[%s921] sm:$0xf]
        %v924 = vsel %vm465, %v922, 0
        %926 = vmatpush.msra.mxu0 0.0
        %927 = vmatpush.msra.mxu0 0.0
        %928 = vmatpush.msra.mxu0 0.0
        %929 = vmatpush.msra.mxu0 0.0
        %930 = vmatpush.msra.mxu0 0.0
        %931 = vmatpush.msra.mxu0 0.0
        %932 = vmatpush.msra.mxu0 0.0
        %933 = vmatpush.msra.mxu0 0.0
        %934 = vmatpush.msra.mxu0 0.0
        %935 = vmatpush.msra.mxu0 0.0
        %936 = vmatpush.msra.mxu0 0.0
        %937 = vmatpush.msra.mxu0 0.0
        %938 = vmatpush.msra.mxu0 0.0
        %939 = vmatpush.msra.mxu0 0.0
        %940 = vmatpush.msra.mxu0 0.0
        %941 = vmatpush.msra.mxu0 %v924
        %942 = vmatmul.f32.gmra.mxu0 %v601
        %v943 = vpop.f32.mrf.mxu0
        %v944 = vadd.f32 0.0, %v943
        %945 = vmatmul.f32.gmra.mxu0 %v603
        %v946 = vpop.f32.mrf.mxu0
        %v947 = vadd.f32 0.0, %v946
        %948 = vmatmul.f32.gmra.mxu0 %v605
        %v949 = vpop.f32.mrf.mxu0
        %v950 = vadd.f32 0.0, %v949
        %951 = vmatmul.f32.gmra.mxu0 %v607
        %v952 = vpop.f32.mrf.mxu0
        %v953 = vadd.f32 0.0, %v952
        %954 = vmatmul.f32.gmra.mxu0 %v609
        %v955 = vpop.f32.mrf.mxu0
        %v956 = vadd.f32 0.0, %v955
        %957 = vmatmul.f32.gmra.mxu0 %v611
        %v958 = vpop.f32.mrf.mxu0
        %v959 = vadd.f32 0.0, %v958
        %960 = vmatmul.f32.gmra.mxu0 %v613
        %v961 = vpop.f32.mrf.mxu0
        %v962 = vadd.f32 0.0, %v961
        %963 = vmatmul.f32.gmra.mxu0 %v615
        %v964 = vpop.f32.mrf.mxu0
        %v965 = vadd.f32 0.0, %v964
        %966 = vmatmul.f32.gmra.mxu0 %v617
        %v967 = vpop.f32.mrf.mxu0
        %v968 = vadd.f32 0.0, %v967
        %969 = vmatmul.f32.gmra.mxu0 %v619
        %v970 = vpop.f32.mrf.mxu0
        %v971 = vadd.f32 0.0, %v970
        %972 = vmatmul.f32.gmra.mxu0 %v621
        %v973 = vpop.f32.mrf.mxu0
        %v974 = vadd.f32 0.0, %v973
        %975 = vmatmul.f32.gmra.mxu0 %v623
        %v976 = vpop.f32.mrf.mxu0
        %v977 = vadd.f32 0.0, %v976
        %978 = vmatmul.f32.gmra.mxu0 %v625
        %v979 = vpop.f32.mrf.mxu0
        %v980 = vadd.f32 0.0, %v979
        %981 = vmatmul.f32.gmra.mxu0 %v627
        %v982 = vpop.f32.mrf.mxu0
        %v983 = vadd.f32 0.0, %v982
        %984 = vmatmul.f32.gmra.mxu0 %v629
        %v985 = vpop.f32.mrf.mxu0
        %v986 = vadd.f32 0.0, %v985
        %987 = vmatmul.f32.gmra.mxu0 %v631
        %v988 = vpop.f32.mrf.mxu0
        %v989 = vadd.f32 0.0, %v988
        %990 = vdwg.mxu0
        %v991 = vadd.f32 %v413, %v944
        %v992 = vadd.f32 %v413, %v947
        %v993 = vadd.f32 %v413, %v950
        %v994 = vadd.f32 %v413, %v953
        %v995 = vadd.f32 %v413, %v956
        %v996 = vadd.f32 %v413, %v959
        %v997 = vadd.f32 %v413, %v962
        %v998 = vadd.f32 %v413, %v965
        %v999 = vadd.f32 %v413, %v968
        %v1000 = vadd.f32 %v413, %v971
        %v1001 = vadd.f32 %v413, %v974
        %v1002 = vadd.f32 %v413, %v977
        %v1003 = vadd.f32 %v413, %v980
        %v1004 = vadd.f32 %v413, %v983
        %v1005 = vadd.f32 %v413, %v986
        %v1006 = vadd.f32 %v413, %v989
        %vm1007 = vcmask 1045504
        %v1008 = vrot.slane %v381, 2
        %v1009 = vrot.slane %v382, 2
        %v1010 = vsel %vm1007, %v1008, %v1009
        %v1011 = vrot.slane %v383, 2
        %v1012 = vsel %vm1007, %v1009, %v1011
        %v1013 = vrot.slane %v384, 2
        %v1014 = vrot.slane %v385, 2
        %v1015 = vsel %vm1007, %v1013, %v1014
        %v1016 = vrot.slane %v386, 2
        %v1017 = vsel %vm1007, %v1014, %v1016
        %v1018 = vrot.slane %v387, 2
        %v1019 = vrot.slane %v388, 2
        %v1020 = vsel %vm1007, %v1018, %v1019
        %v1021 = vrot.slane %v389, 2
        %v1022 = vsel %vm1007, %v1019, %v1021
        %v1023 = vrot.slane %v390, 2
        %v1024 = vrot.slane %v391, 2
        %v1025 = vsel %vm1007, %v1023, %v1024
        %v1026 = vrot.slane %v392, 2
        %v1027 = vsel %vm1007, %v1024, %v1026
        %v1028 = vrot.slane %v393, 2
        %v1029 = vrot.slane %v394, 2
        %v1030 = vsel %vm1007, %v1028, %v1029
        %v1031 = vrot.slane %v395, 2
        %v1032 = vsel %vm1007, %v1029, %v1031
        %v1033 = vrot.slane %v396, 2
        %v1034 = vrot.slane %v397, 2
        %v1035 = vsel %vm1007, %v1033, %v1034
        %v1036 = vrot.slane %v398, 2
        %v1037 = vsel %vm1007, %v1034, %v1036
        %v1038 = vrot.slane %v399, 2
        %v1039 = vrot.slane %v400, 2
        %v1040 = vsel %vm1007, %v1038, %v1039
        %v1041 = vrot.slane %v401, 2
        %v1042 = vsel %vm1007, %v1039, %v1041
        %v1043 = vrot.slane %v402, 2
        %v1044 = vrot.slane %v403, 2
        %v1045 = vsel %vm1007, %v1043, %v1044
        %v1046 = vrot.slane %v404, 2
        %v1047 = vsel %vm1007, %v1044, %v1046
        %s1048 = scalar_lea.vmem %s3, 20
        %v1049 = vld [vmem:[%s1048] sm:$0xf]
        %v1050 = vsel %vm416, %v1010, 0
        %v1052 = vsel %vm416, %v1012, 0
        %v1054 = vsel %vm416, %v1015, 0
        %v1056 = vsel %vm416, %v1017, 0
        %v1058 = vsel %vm416, %v1020, 0
        %v1060 = vsel %vm416, %v1022, 0
        %v1062 = vsel %vm416, %v1025, 0
        %v1064 = vsel %vm416, %v1027, 0
        %v1066 = vsel %vm416, %v1030, 0
        %v1068 = vsel %vm416, %v1032, 0
        %v1070 = vsel %vm416, %v1035, 0
        %v1072 = vsel %vm416, %v1037, 0
        %v1074 = vsel %vm416, %v1040, 0
        %v1076 = vsel %vm416, %v1042, 0
        %v1078 = vsel %vm416, %v1045, 0
        %v1080 = vsel %vm416, %v1047, 0
        %v1083 = vsel %vm465, %v1049, 0
        %1085 = vmatpush.msra.mxu0 0.0
        %1086 = vmatpush.msra.mxu0 0.0
        %1087 = vmatpush.msra.mxu0 0.0
        %1088 = vmatpush.msra.mxu0 0.0
        %1089 = vmatpush.msra.mxu0 0.0
        %1090 = vmatpush.msra.mxu0 0.0
        %1091 = vmatpush.msra.mxu0 0.0
        %1092 = vmatpush.msra.mxu0 0.0
        %1093 = vmatpush.msra.mxu0 0.0
        %1094 = vmatpush.msra.mxu0 0.0
        %1095 = vmatpush.msra.mxu0 0.0
        %1096 = vmatpush.msra.mxu0 0.0
        %1097 = vmatpush.msra.mxu0 0.0
        %1098 = vmatpush.msra.mxu0 0.0
        %1099 = vmatpush.msra.mxu0 0.0
        %1100 = vmatpush.msra.mxu0 %v1083
        %1101 = vmatmul.f32.gmra.mxu0 %v1050
        %v1102 = vpop.f32.mrf.mxu0
        %v1103 = vadd.f32 0.0, %v1102
        %1104 = vmatmul.f32.gmra.mxu0 %v1052
        %v1105 = vpop.f32.mrf.mxu0
        %v1106 = vadd.f32 0.0, %v1105
        %1107 = vmatmul.f32.gmra.mxu0 %v1054
        %v1108 = vpop.f32.mrf.mxu0
        %v1109 = vadd.f32 0.0, %v1108
        %1110 = vmatmul.f32.gmra.mxu0 %v1056
        %v1111 = vpop.f32.mrf.mxu0
        %v1112 = vadd.f32 0.0, %v1111
        %1113 = vmatmul.f32.gmra.mxu0 %v1058
        %v1114 = vpop.f32.mrf.mxu0
        %v1115 = vadd.f32 0.0, %v1114
        %1116 = vmatmul.f32.gmra.mxu0 %v1060
        %v1117 = vpop.f32.mrf.mxu0
        %v1118 = vadd.f32 0.0, %v1117
        %1119 = vmatmul.f32.gmra.mxu0 %v1062
        %v1120 = vpop.f32.mrf.mxu0
        %v1121 = vadd.f32 0.0, %v1120
        %1122 = vmatmul.f32.gmra.mxu0 %v1064
        %v1123 = vpop.f32.mrf.mxu0
        %v1124 = vadd.f32 0.0, %v1123
        %1125 = vmatmul.f32.gmra.mxu0 %v1066
        %v1126 = vpop.f32.mrf.mxu0
        %v1127 = vadd.f32 0.0, %v1126
        %1128 = vmatmul.f32.gmra.mxu0 %v1068
        %v1129 = vpop.f32.mrf.mxu0
        %v1130 = vadd.f32 0.0, %v1129
        %1131 = vmatmul.f32.gmra.mxu0 %v1070
        %v1132 = vpop.f32.mrf.mxu0
        %v1133 = vadd.f32 0.0, %v1132
        %1134 = vmatmul.f32.gmra.mxu0 %v1072
        %v1135 = vpop.f32.mrf.mxu0
        %v1136 = vadd.f32 0.0, %v1135
        %1137 = vmatmul.f32.gmra.mxu0 %v1074
        %v1138 = vpop.f32.mrf.mxu0
        %v1139 = vadd.f32 0.0, %v1138
        %1140 = vmatmul.f32.gmra.mxu0 %v1076
        %v1141 = vpop.f32.mrf.mxu0
        %v1142 = vadd.f32 0.0, %v1141
        %1143 = vmatmul.f32.gmra.mxu0 %v1078
        %v1144 = vpop.f32.mrf.mxu0
        %v1145 = vadd.f32 0.0, %v1144
        %1146 = vmatmul.f32.gmra.mxu0 %v1080
        %v1147 = vpop.f32.mrf.mxu0
        %v1148 = vadd.f32 0.0, %v1147
        %1149 = vdwg.mxu0
        %v1150 = vadd.f32 %v991, %v1103
        %v1151 = vadd.f32 %v992, %v1106
        %v1152 = vadd.f32 %v993, %v1109
        %v1153 = vadd.f32 %v994, %v1112
        %v1154 = vadd.f32 %v995, %v1115
        %v1155 = vadd.f32 %v996, %v1118
        %v1156 = vadd.f32 %v997, %v1121
        %v1157 = vadd.f32 %v998, %v1124
        %v1158 = vadd.f32 %v999, %v1127
        %v1159 = vadd.f32 %v1000, %v1130
        %v1160 = vadd.f32 %v1001, %v1133
        %v1161 = vadd.f32 %v1002, %v1136
        %v1162 = vadd.f32 %v1003, %v1139
        %v1163 = vadd.f32 %v1004, %v1142
        %v1164 = vadd.f32 %v1005, %v1145
        %v1165 = vadd.f32 %v1006, %v1148
        %s1166 = scalar_lea.vmem %s3, 24
        %v1167 = vld [vmem:[%s1166] sm:$0xf]
        %v1169 = vsel %vm465, %v1167, 0
        %1171 = vmatpush.msra.mxu0 0.0
        %1172 = vmatpush.msra.mxu0 0.0
        %1173 = vmatpush.msra.mxu0 0.0
        %1174 = vmatpush.msra.mxu0 0.0
        %1175 = vmatpush.msra.mxu0 0.0
        %1176 = vmatpush.msra.mxu0 0.0
        %1177 = vmatpush.msra.mxu0 0.0
        %1178 = vmatpush.msra.mxu0 0.0
        %1179 = vmatpush.msra.mxu0 0.0
        %1180 = vmatpush.msra.mxu0 0.0
        %1181 = vmatpush.msra.mxu0 0.0
        %1182 = vmatpush.msra.mxu0 0.0
        %1183 = vmatpush.msra.mxu0 0.0
        %1184 = vmatpush.msra.mxu0 0.0
        %1185 = vmatpush.msra.mxu0 0.0
        %1186 = vmatpush.msra.mxu0 %v1169
        %1187 = vmatmul.f32.gmra.mxu0 %v605
        %v1188 = vpop.f32.mrf.mxu0
        %v1189 = vadd.f32 0.0, %v1188
        %1190 = vmatmul.f32.gmra.mxu0 %v607
        %v1191 = vpop.f32.mrf.mxu0
        %v1192 = vadd.f32 0.0, %v1191
        %1193 = vmatmul.f32.gmra.mxu0 %v609
        %v1194 = vpop.f32.mrf.mxu0
        %v1195 = vadd.f32 0.0, %v1194
        %1196 = vmatmul.f32.gmra.mxu0 %v611
        %v1197 = vpop.f32.mrf.mxu0
        %v1198 = vadd.f32 0.0, %v1197
        %1199 = vmatmul.f32.gmra.mxu0 %v613
        %v1200 = vpop.f32.mrf.mxu0
        %v1201 = vadd.f32 0.0, %v1200
        %1202 = vmatmul.f32.gmra.mxu0 %v615
        %v1203 = vpop.f32.mrf.mxu0
        %v1204 = vadd.f32 0.0, %v1203
        %1205 = vmatmul.f32.gmra.mxu0 %v617
        %v1206 = vpop.f32.mrf.mxu0
        %v1207 = vadd.f32 0.0, %v1206
        %1208 = vmatmul.f32.gmra.mxu0 %v619
        %v1209 = vpop.f32.mrf.mxu0
        %v1210 = vadd.f32 0.0, %v1209
        %1211 = vmatmul.f32.gmra.mxu0 %v621
        %v1212 = vpop.f32.mrf.mxu0
        %v1213 = vadd.f32 0.0, %v1212
        %1214 = vmatmul.f32.gmra.mxu0 %v623
        %v1215 = vpop.f32.mrf.mxu0
        %v1216 = vadd.f32 0.0, %v1215
        %1217 = vmatmul.f32.gmra.mxu0 %v625
        %v1218 = vpop.f32.mrf.mxu0
        %v1219 = vadd.f32 0.0, %v1218
        %1220 = vmatmul.f32.gmra.mxu0 %v627
        %v1221 = vpop.f32.mrf.mxu0
        %v1222 = vadd.f32 0.0, %v1221
        %1223 = vmatmul.f32.gmra.mxu0 %v629
        %v1224 = vpop.f32.mrf.mxu0
        %v1225 = vadd.f32 0.0, %v1224
        %1226 = vmatmul.f32.gmra.mxu0 %v631
        %v1227 = vpop.f32.mrf.mxu0
        %v1228 = vadd.f32 0.0, %v1227
        %1229 = vmatmul.f32.gmra.mxu0 %v817
        %v1230 = vpop.f32.mrf.mxu0
        %v1231 = vadd.f32 0.0, %v1230
        %1232 = vmatmul.f32.gmra.mxu0 %v819
        %v1233 = vpop.f32.mrf.mxu0
        %v1234 = vadd.f32 0.0, %v1233
        %1235 = vdwg.mxu0
        %v1236 = vadd.f32 %v1150, %v1189
        %v1237 = vadd.f32 %v1151, %v1192
        %v1238 = vadd.f32 %v1152, %v1195
        %v1239 = vadd.f32 %v1153, %v1198
        %v1240 = vadd.f32 %v1154, %v1201
        %v1241 = vadd.f32 %v1155, %v1204
        %v1242 = vadd.f32 %v1156, %v1207
        %v1243 = vadd.f32 %v1157, %v1210
        %v1244 = vadd.f32 %v1158, %v1213
        %v1245 = vadd.f32 %v1159, %v1216
        %v1246 = vadd.f32 %v1160, %v1219
        %v1247 = vadd.f32 %v1161, %v1222
        %v1248 = vadd.f32 %v1162, %v1225
        %v1249 = vadd.f32 %v1163, %v1228
        %v1250 = vadd.f32 %v1164, %v1231
        %v1251 = vadd.f32 %v1165, %v1234
        %v1252 = vrot.slane %v405, 2
        %v1253 = vrot.slane %v406, 2
        %v1254 = vsel %vm1007, %v1252, %v1253
        %v1255 = vrot.slane %v407, 2
        %v1256 = vsel %vm1007, %v1253, %v1255
        %s1257 = scalar_lea.vmem %s3, 28
        %v1258 = vld [vmem:[%s1257] sm:$0xf]
        %v1259 = vsel %vm416, %v1254, 0
        %v1261 = vsel %vm416, %v1256, 0
        %v1264 = vsel %vm465, %v1258, 0
        %1266 = vmatpush.msra.mxu0 0.0
        %1267 = vmatpush.msra.mxu0 0.0
        %1268 = vmatpush.msra.mxu0 0.0
        %1269 = vmatpush.msra.mxu0 0.0
        %1270 = vmatpush.msra.mxu0 0.0
        %1271 = vmatpush.msra.mxu0 0.0
        %1272 = vmatpush.msra.mxu0 0.0
        %1273 = vmatpush.msra.mxu0 0.0
        %1274 = vmatpush.msra.mxu0 0.0
        %1275 = vmatpush.msra.mxu0 0.0
        %1276 = vmatpush.msra.mxu0 0.0
        %1277 = vmatpush.msra.mxu0 0.0
        %1278 = vmatpush.msra.mxu0 0.0
        %1279 = vmatpush.msra.mxu0 0.0
        %1280 = vmatpush.msra.mxu0 0.0
        %1281 = vmatpush.msra.mxu0 %v1264
        %1282 = vmatmul.f32.gmra.mxu0 %v1054
        %v1283 = vpop.f32.mrf.mxu0
        %v1284 = vadd.f32 0.0, %v1283
        %1285 = vmatmul.f32.gmra.mxu0 %v1056
        %v1286 = vpop.f32.mrf.mxu0
        %v1287 = vadd.f32 0.0, %v1286
        %1288 = vmatmul.f32.gmra.mxu0 %v1058
        %v1289 = vpop.f32.mrf.mxu0
        %v1290 = vadd.f32 0.0, %v1289
        %1291 = vmatmul.f32.gmra.mxu0 %v1060
        %v1292 = vpop.f32.mrf.mxu0
        %v1293 = vadd.f32 0.0, %v1292
        %1294 = vmatmul.f32.gmra.mxu0 %v1062
        %v1295 = vpop.f32.mrf.mxu0
        %v1296 = vadd.f32 0.0, %v1295
        %1297 = vmatmul.f32.gmra.mxu0 %v1064
        %v1298 = vpop.f32.mrf.mxu0
        %v1299 = vadd.f32 0.0, %v1298
        %1300 = vmatmul.f32.gmra.mxu0 %v1066
        %v1301 = vpop.f32.mrf.mxu0
        %v1302 = vadd.f32 0.0, %v1301
        %1303 = vmatmul.f32.gmra.mxu0 %v1068
        %v1304 = vpop.f32.mrf.mxu0
        %v1305 = vadd.f32 0.0, %v1304
        %1306 = vmatmul.f32.gmra.mxu0 %v1070
        %v1307 = vpop.f32.mrf.mxu0
        %v1308 = vadd.f32 0.0, %v1307
        %1309 = vmatmul.f32.gmra.mxu0 %v1072
        %v1310 = vpop.f32.mrf.mxu0
        %v1311 = vadd.f32 0.0, %v1310
        %1312 = vmatmul.f32.gmra.mxu0 %v1074
        %v1313 = vpop.f32.mrf.mxu0
        %v1314 = vadd.f32 0.0, %v1313
        %1315 = vmatmul.f32.gmra.mxu0 %v1076
        %v1316 = vpop.f32.mrf.mxu0
        %v1317 = vadd.f32 0.0, %v1316
        %1318 = vmatmul.f32.gmra.mxu0 %v1078
        %v1319 = vpop.f32.mrf.mxu0
        %v1320 = vadd.f32 0.0, %v1319
        %1321 = vmatmul.f32.gmra.mxu0 %v1080
        %v1322 = vpop.f32.mrf.mxu0
        %v1323 = vadd.f32 0.0, %v1322
        %1324 = vmatmul.f32.gmra.mxu0 %v1259
        %v1325 = vpop.f32.mrf.mxu0
        %v1326 = vadd.f32 0.0, %v1325
        %1327 = vmatmul.f32.gmra.mxu0 %v1261
        %v1328 = vpop.f32.mrf.mxu0
        %v1329 = vadd.f32 0.0, %v1328
        %1330 = vdwg.mxu0
        %v1331 = vadd.f32 %v1236, %v1284
        %v1332 = vadd.f32 %v1237, %v1287
        %v1333 = vadd.f32 %v1238, %v1290
        %v1334 = vadd.f32 %v1239, %v1293
        %v1335 = vadd.f32 %v1240, %v1296
        %v1336 = vadd.f32 %v1241, %v1299
        %v1337 = vadd.f32 %v1242, %v1302
        %v1338 = vadd.f32 %v1243, %v1305
        %v1339 = vadd.f32 %v1244, %v1308
        %v1340 = vadd.f32 %v1245, %v1311
        %v1341 = vadd.f32 %v1246, %v1314
        %v1342 = vadd.f32 %v1247, %v1317
        %v1343 = vadd.f32 %v1248, %v1320
        %v1344 = vadd.f32 %v1249, %v1323
        %v1345 = vadd.f32 %v1250, %v1326
        %v1346 = vadd.f32 %v1251, %v1329
        %s1347 = scalar_lea.vmem %s330, 128 [#allocation2]
        %1348 = vst.msk [vmem:[%s1347] sm:$0xff] %vm416, %v1331
        %1349 = vst.msk [vmem:[%s1347 + $0x8] sm:$0xff] %vm416, %v1332
        %1350 = vst.msk [vmem:[%s1347 + $0x10] sm:$0xff] %vm416, %v1333
        %1351 = vst.msk [vmem:[%s1347 + $0x18] sm:$0xff] %vm416, %v1334
        %1352 = vst.msk [vmem:[%s1347 + $0x20] sm:$0xff] %vm416, %v1335
        %1353 = vst.msk [vmem:[%s1347 + $0x28] sm:$0xff] %vm416, %v1336
        %1354 = vst.msk [vmem:[%s1347 + $0x30] sm:$0xff] %vm416, %v1337
        %1355 = vst.msk [vmem:[%s1347 + $0x38] sm:$0xff] %vm416, %v1338
        %1356 = vst.msk [vmem:[%s1347 + $0x40] sm:$0xff] %vm416, %v1339
        %1357 = vst.msk [vmem:[%s1347 + $0x48] sm:$0xff] %vm416, %v1340
        %1358 = vst.msk [vmem:[%s1347 + $0x50] sm:$0xff] %vm416, %v1341
        %1359 = vst.msk [vmem:[%s1347 + $0x58] sm:$0xff] %vm416, %v1342
        %1360 = vst.msk [vmem:[%s1347 + $0x60] sm:$0xff] %vm416, %v1343
        %1361 = vst.msk [vmem:[%s1347 + $0x68] sm:$0xff] %vm416, %v1344
        %1362 = vst.msk [vmem:[%s1347 + $0x70] sm:$0xff] %vm416, %v1345
        %1363 = vst.msk [vmem:[%s1347 + $0x78] sm:$0xff] %vm416, %v1346
        %s1364 = scalar_lea.vmem %s3, 32
        %v1365 = vld [vmem:[%s1364] sm:$0xf]
        %v1367 = vsel %vm465, %v1365, 0
        %1369 = vmatpush.msra.mxu0 0.0
        %1370 = vmatpush.msra.mxu0 0.0
        %1371 = vmatpush.msra.mxu0 0.0
        %1372 = vmatpush.msra.mxu0 0.0
        %1373 = vmatpush.msra.mxu0 0.0
        %1374 = vmatpush.msra.mxu0 0.0
        %1375 = vmatpush.msra.mxu0 0.0
        %1376 = vmatpush.msra.mxu0 0.0
        %1377 = vmatpush.msra.mxu0 0.0
        %1378 = vmatpush.msra.mxu0 0.0
        %1379 = vmatpush.msra.mxu0 0.0
        %1380 = vmatpush.msra.mxu0 0.0
        %1381 = vmatpush.msra.mxu0 0.0
        %1382 = vmatpush.msra.mxu0 0.0
        %1383 = vmatpush.msra.mxu0 0.0
        %1384 = vmatpush.msra.mxu0 %v1367
        %1385 = vmatmul.f32.gmra.mxu0 %v424
        %v1386 = vpop.f32.mrf.mxu0
        %v1387 = vadd.f32 0.0, %v1386
        %1388 = vmatmul.f32.gmra.mxu0 %v427
        %v1389 = vpop.f32.mrf.mxu0
        %v1390 = vadd.f32 0.0, %v1389
        %1391 = vmatmul.f32.gmra.mxu0 %v430
        %v1392 = vpop.f32.mrf.mxu0
        %v1393 = vadd.f32 0.0, %v1392
        %1394 = vmatmul.f32.gmra.mxu0 %v433
        %v1395 = vpop.f32.mrf.mxu0
        %v1396 = vadd.f32 0.0, %v1395
        %1397 = vmatmul.f32.gmra.mxu0 %v436
        %v1398 = vpop.f32.mrf.mxu0
        %v1399 = vadd.f32 0.0, %v1398
        %1400 = vmatmul.f32.gmra.mxu0 %v439
        %v1401 = vpop.f32.mrf.mxu0
        %v1402 = vadd.f32 0.0, %v1401
        %1403 = vmatmul.f32.gmra.mxu0 %v442
        %v1404 = vpop.f32.mrf.mxu0
        %v1405 = vadd.f32 0.0, %v1404
        %1406 = vmatmul.f32.gmra.mxu0 %v445
        %v1407 = vpop.f32.mrf.mxu0
        %v1408 = vadd.f32 0.0, %v1407
        %1409 = vmatmul.f32.gmra.mxu0 %v448
        %v1410 = vpop.f32.mrf.mxu0
        %v1411 = vadd.f32 0.0, %v1410
        %1412 = vmatmul.f32.gmra.mxu0 %v451
        %v1413 = vpop.f32.mrf.mxu0
        %v1414 = vadd.f32 0.0, %v1413
        %1415 = vmatmul.f32.gmra.mxu0 %v454
        %v1416 = vpop.f32.mrf.mxu0
        %v1417 = vadd.f32 0.0, %v1416
        %1418 = vmatmul.f32.gmra.mxu0 %v457
        %v1419 = vpop.f32.mrf.mxu0
        %v1420 = vadd.f32 0.0, %v1419
        %1421 = vmatmul.f32.gmra.mxu0 %v460
        %v1422 = vpop.f32.mrf.mxu0
        %v1423 = vadd.f32 0.0, %v1422
        %1424 = vmatmul.f32.gmra.mxu0 %v463
        %v1425 = vpop.f32.mrf.mxu0
        %v1426 = vadd.f32 0.0, %v1425
        %1427 = vmatmul.f32.gmra.mxu0 %v720
        %v1428 = vpop.f32.mrf.mxu0
        %v1429 = vadd.f32 0.0, %v1428
        %1430 = vmatmul.f32.gmra.mxu0 %v723
        %v1431 = vpop.f32.mrf.mxu0
        %v1432 = vadd.f32 0.0, %v1431
        %1433 = vdwg.mxu0
        %v1434 = vadd.f32 %v413, %v1387
        %v1435 = vadd.f32 %v413, %v1390
        %v1436 = vadd.f32 %v413, %v1393
        %v1437 = vadd.f32 %v413, %v1396
        %v1438 = vadd.f32 %v413, %v1399
        %v1439 = vadd.f32 %v413, %v1402
        %v1440 = vadd.f32 %v413, %v1405
        %v1441 = vadd.f32 %v413, %v1408
        %v1442 = vadd.f32 %v413, %v1411
        %v1443 = vadd.f32 %v413, %v1414
        %v1444 = vadd.f32 %v413, %v1417
        %v1445 = vadd.f32 %v413, %v1420
        %v1446 = vadd.f32 %v413, %v1423
        %v1447 = vadd.f32 %v413, %v1426
        %v1448 = vadd.f32 %v413, %v1429
        %v1449 = vadd.f32 %v413, %v1432
        %s1450 = scalar_lea.vmem %s3, 36
        %v1451 = vld [vmem:[%s1450] sm:$0xf]
        %v1453 = vsel %vm465, %v1451, 0
        %1455 = vmatpush.msra.mxu0 0.0
        %1456 = vmatpush.msra.mxu0 0.0
        %1457 = vmatpush.msra.mxu0 0.0
        %1458 = vmatpush.msra.mxu0 0.0
        %1459 = vmatpush.msra.mxu0 0.0
        %1460 = vmatpush.msra.mxu0 0.0
        %1461 = vmatpush.msra.mxu0 0.0
        %1462 = vmatpush.msra.mxu0 0.0
        %1463 = vmatpush.msra.mxu0 0.0
        %1464 = vmatpush.msra.mxu0 0.0
        %1465 = vmatpush.msra.mxu0 0.0
        %1466 = vmatpush.msra.mxu0 0.0
        %1467 = vmatpush.msra.mxu0 0.0
        %1468 = vmatpush.msra.mxu0 0.0
        %1469 = vmatpush.msra.mxu0 0.0
        %1470 = vmatpush.msra.mxu0 %v1453
        %1471 = vmatmul.f32.gmra.mxu0 %v605
        %v1472 = vpop.f32.mrf.mxu0
        %v1473 = vadd.f32 0.0, %v1472
        %1474 = vmatmul.f32.gmra.mxu0 %v607
        %v1475 = vpop.f32.mrf.mxu0
        %v1476 = vadd.f32 0.0, %v1475
        %1477 = vmatmul.f32.gmra.mxu0 %v609
        %v1478 = vpop.f32.mrf.mxu0
        %v1479 = vadd.f32 0.0, %v1478
        %1480 = vmatmul.f32.gmra.mxu0 %v611
        %v1481 = vpop.f32.mrf.mxu0
        %v1482 = vadd.f32 0.0, %v1481
        %1483 = vmatmul.f32.gmra.mxu0 %v613
        %v1484 = vpop.f32.mrf.mxu0
        %v1485 = vadd.f32 0.0, %v1484
        %1486 = vmatmul.f32.gmra.mxu0 %v615
        %v1487 = vpop.f32.mrf.mxu0
        %v1488 = vadd.f32 0.0, %v1487
        %1489 = vmatmul.f32.gmra.mxu0 %v617
        %v1490 = vpop.f32.mrf.mxu0
        %v1491 = vadd.f32 0.0, %v1490
        %1492 = vmatmul.f32.gmra.mxu0 %v619
        %v1493 = vpop.f32.mrf.mxu0
        %v1494 = vadd.f32 0.0, %v1493
        %1495 = vmatmul.f32.gmra.mxu0 %v621
        %v1496 = vpop.f32.mrf.mxu0
        %v1497 = vadd.f32 0.0, %v1496
        %1498 = vmatmul.f32.gmra.mxu0 %v623
        %v1499 = vpop.f32.mrf.mxu0
        %v1500 = vadd.f32 0.0, %v1499
        %1501 = vmatmul.f32.gmra.mxu0 %v625
        %v1502 = vpop.f32.mrf.mxu0
        %v1503 = vadd.f32 0.0, %v1502
        %1504 = vmatmul.f32.gmra.mxu0 %v627
        %v1505 = vpop.f32.mrf.mxu0
        %v1506 = vadd.f32 0.0, %v1505
        %1507 = vmatmul.f32.gmra.mxu0 %v629
        %v1508 = vpop.f32.mrf.mxu0
        %v1509 = vadd.f32 0.0, %v1508
        %1510 = vmatmul.f32.gmra.mxu0 %v631
        %v1511 = vpop.f32.mrf.mxu0
        %v1512 = vadd.f32 0.0, %v1511
        %1513 = vmatmul.f32.gmra.mxu0 %v817
        %v1514 = vpop.f32.mrf.mxu0
        %v1515 = vadd.f32 0.0, %v1514
        %1516 = vmatmul.f32.gmra.mxu0 %v819
        %v1517 = vpop.f32.mrf.mxu0
        %v1518 = vadd.f32 0.0, %v1517
        %1519 = vdwg.mxu0
        %v1520 = vadd.f32 %v1434, %v1473
        %v1521 = vadd.f32 %v1435, %v1476
        %v1522 = vadd.f32 %v1436, %v1479
        %v1523 = vadd.f32 %v1437, %v1482
        %v1524 = vadd.f32 %v1438, %v1485
        %v1525 = vadd.f32 %v1439, %v1488
        %v1526 = vadd.f32 %v1440, %v1491
        %v1527 = vadd.f32 %v1441, %v1494
        %v1528 = vadd.f32 %v1442, %v1497
        %v1529 = vadd.f32 %v1443, %v1500
        %v1530 = vadd.f32 %v1444, %v1503
        %v1531 = vadd.f32 %v1445, %v1506
        %v1532 = vadd.f32 %v1446, %v1509
        %v1533 = vadd.f32 %v1447, %v1512
        %v1534 = vadd.f32 %v1448, %v1515
        %v1535 = vadd.f32 %v1449, %v1518
        %s1536 = scalar_lea.vmem %s3, 40
        %v1537 = vld [vmem:[%s1536] sm:$0xf]
        %v1539 = vsel %vm416, %v408, 0
        %v1542 = vsel %vm416, %v409, 0
        %v1545 = vsel %vm465, %v1537, 0
        %1547 = vmatpush.msra.mxu0 0.0
        %1548 = vmatpush.msra.mxu0 0.0
        %1549 = vmatpush.msra.mxu0 0.0
        %1550 = vmatpush.msra.mxu0 0.0
        %1551 = vmatpush.msra.mxu0 0.0
        %1552 = vmatpush.msra.mxu0 0.0
        %1553 = vmatpush.msra.mxu0 0.0
        %1554 = vmatpush.msra.mxu0 0.0
        %1555 = vmatpush.msra.mxu0 0.0
        %1556 = vmatpush.msra.mxu0 0.0
        %1557 = vmatpush.msra.mxu0 0.0
        %1558 = vmatpush.msra.mxu0 0.0
        %1559 = vmatpush.msra.mxu0 0.0
        %1560 = vmatpush.msra.mxu0 0.0
        %1561 = vmatpush.msra.mxu0 0.0
        %1562 = vmatpush.msra.mxu0 %v1545
        %1563 = vmatmul.f32.gmra.mxu0 %v430
        %v1564 = vpop.f32.mrf.mxu0
        %v1565 = vadd.f32 0.0, %v1564
        %1566 = vmatmul.f32.gmra.mxu0 %v433
        %v1567 = vpop.f32.mrf.mxu0
        %v1568 = vadd.f32 0.0, %v1567
        %1569 = vmatmul.f32.gmra.mxu0 %v436
        %v1570 = vpop.f32.mrf.mxu0
        %v1571 = vadd.f32 0.0, %v1570
        %1572 = vmatmul.f32.gmra.mxu0 %v439
        %v1573 = vpop.f32.mrf.mxu0
        %v1574 = vadd.f32 0.0, %v1573
        %1575 = vmatmul.f32.gmra.mxu0 %v442
        %v1576 = vpop.f32.mrf.mxu0
        %v1577 = vadd.f32 0.0, %v1576
        %1578 = vmatmul.f32.gmra.mxu0 %v445
        %v1579 = vpop.f32.mrf.mxu0
        %v1580 = vadd.f32 0.0, %v1579
        %1581 = vmatmul.f32.gmra.mxu0 %v448
        %v1582 = vpop.f32.mrf.mxu0
        %v1583 = vadd.f32 0.0, %v1582
        %1584 = vmatmul.f32.gmra.mxu0 %v451
        %v1585 = vpop.f32.mrf.mxu0
        %v1586 = vadd.f32 0.0, %v1585
        %1587 = vmatmul.f32.gmra.mxu0 %v454
        %v1588 = vpop.f32.mrf.mxu0
        %v1589 = vadd.f32 0.0, %v1588
        %1590 = vmatmul.f32.gmra.mxu0 %v457
        %v1591 = vpop.f32.mrf.mxu0
        %v1592 = vadd.f32 0.0, %v1591
        %1593 = vmatmul.f32.gmra.mxu0 %v460
        %v1594 = vpop.f32.mrf.mxu0
        %v1595 = vadd.f32 0.0, %v1594
        %1596 = vmatmul.f32.gmra.mxu0 %v463
        %v1597 = vpop.f32.mrf.mxu0
        %v1598 = vadd.f32 0.0, %v1597
        %1599 = vmatmul.f32.gmra.mxu0 %v720
        %v1600 = vpop.f32.mrf.mxu0
        %v1601 = vadd.f32 0.0, %v1600
        %1602 = vmatmul.f32.gmra.mxu0 %v723
        %v1603 = vpop.f32.mrf.mxu0
        %v1604 = vadd.f32 0.0, %v1603
        %1605 = vmatmul.f32.gmra.mxu0 %v1539
        %v1606 = vpop.f32.mrf.mxu0
        %v1607 = vadd.f32 0.0, %v1606
        %1608 = vmatmul.f32.gmra.mxu0 %v1542
        %v1609 = vpop.f32.mrf.mxu0
        %v1610 = vadd.f32 0.0, %v1609
        %1611 = vdwg.mxu0
        %v1612 = vadd.f32 %v1520, %v1565
        %v1613 = vadd.f32 %v1521, %v1568
        %v1614 = vadd.f32 %v1522, %v1571
        %v1615 = vadd.f32 %v1523, %v1574
        %v1616 = vadd.f32 %v1524, %v1577
        %v1617 = vadd.f32 %v1525, %v1580
        %v1618 = vadd.f32 %v1526, %v1583
        %v1619 = vadd.f32 %v1527, %v1586
        %v1620 = vadd.f32 %v1528, %v1589
        %v1621 = vadd.f32 %v1529, %v1592
        %v1622 = vadd.f32 %v1530, %v1595
        %v1623 = vadd.f32 %v1531, %v1598
        %v1624 = vadd.f32 %v1532, %v1601
        %v1625 = vadd.f32 %v1533, %v1604
        %v1626 = vadd.f32 %v1534, %v1607
        %v1627 = vadd.f32 %v1535, %v1610
        %v1629 = vrot.slane %v408, 1
        %v1630 = vrot.slane %v409, 1
        %v1631 = vsel %vm558, %v1629, %v1630
        %v1632 = vrot.slane %v410, 1
        %v1633 = vsel %vm558, %v1630, %v1632
        %s1634 = scalar_lea.vmem %s3, 44
        %v1635 = vld [vmem:[%s1634] sm:$0xf]
        %v1636 = vsel %vm416, %v1631, 0
        %v1638 = vsel %vm416, %v1633, 0
        %v1641 = vsel %vm465, %v1635, 0
        %1643 = vmatpush.msra.mxu0 0.0
        %1644 = vmatpush.msra.mxu0 0.0
        %1645 = vmatpush.msra.mxu0 0.0
        %1646 = vmatpush.msra.mxu0 0.0
        %1647 = vmatpush.msra.mxu0 0.0
        %1648 = vmatpush.msra.mxu0 0.0
        %1649 = vmatpush.msra.mxu0 0.0
        %1650 = vmatpush.msra.mxu0 0.0
        %1651 = vmatpush.msra.mxu0 0.0
        %1652 = vmatpush.msra.mxu0 0.0
        %1653 = vmatpush.msra.mxu0 0.0
        %1654 = vmatpush.msra.mxu0 0.0
        %1655 = vmatpush.msra.mxu0 0.0
        %1656 = vmatpush.msra.mxu0 0.0
        %1657 = vmatpush.msra.mxu0 0.0
        %1658 = vmatpush.msra.mxu0 %v1641
        %1659 = vmatmul.f32.gmra.mxu0 %v609
        %v1660 = vpop.f32.mrf.mxu0
        %v1661 = vadd.f32 0.0, %v1660
        %1662 = vmatmul.f32.gmra.mxu0 %v611
        %v1663 = vpop.f32.mrf.mxu0
        %v1664 = vadd.f32 0.0, %v1663
        %1665 = vmatmul.f32.gmra.mxu0 %v613
        %v1666 = vpop.f32.mrf.mxu0
        %v1667 = vadd.f32 0.0, %v1666
        %1668 = vmatmul.f32.gmra.mxu0 %v615
        %v1669 = vpop.f32.mrf.mxu0
        %v1670 = vadd.f32 0.0, %v1669
        %1671 = vmatmul.f32.gmra.mxu0 %v617
        %v1672 = vpop.f32.mrf.mxu0
        %v1673 = vadd.f32 0.0, %v1672
        %1674 = vmatmul.f32.gmra.mxu0 %v619
        %v1675 = vpop.f32.mrf.mxu0
        %v1676 = vadd.f32 0.0, %v1675
        %1677 = vmatmul.f32.gmra.mxu0 %v621
        %v1678 = vpop.f32.mrf.mxu0
        %v1679 = vadd.f32 0.0, %v1678
        %1680 = vmatmul.f32.gmra.mxu0 %v623
        %v1681 = vpop.f32.mrf.mxu0
        %v1682 = vadd.f32 0.0, %v1681
        %1683 = vmatmul.f32.gmra.mxu0 %v625
        %v1684 = vpop.f32.mrf.mxu0
        %v1685 = vadd.f32 0.0, %v1684
        %1686 = vmatmul.f32.gmra.mxu0 %v627
        %v1687 = vpop.f32.mrf.mxu0
        %v1688 = vadd.f32 0.0, %v1687
        %1689 = vmatmul.f32.gmra.mxu0 %v629
        %v1690 = vpop.f32.mrf.mxu0
        %v1691 = vadd.f32 0.0, %v1690
        %1692 = vmatmul.f32.gmra.mxu0 %v631
        %v1693 = vpop.f32.mrf.mxu0
        %v1694 = vadd.f32 0.0, %v1693
        %1695 = vmatmul.f32.gmra.mxu0 %v817
        %v1696 = vpop.f32.mrf.mxu0
        %v1697 = vadd.f32 0.0, %v1696
        %1698 = vmatmul.f32.gmra.mxu0 %v819
        %v1699 = vpop.f32.mrf.mxu0
        %v1700 = vadd.f32 0.0, %v1699
        %1701 = vmatmul.f32.gmra.mxu0 %v1636
        %v1702 = vpop.f32.mrf.mxu0
        %v1703 = vadd.f32 0.0, %v1702
        %1704 = vmatmul.f32.gmra.mxu0 %v1638
        %v1705 = vpop.f32.mrf.mxu0
        %v1706 = vadd.f32 0.0, %v1705
        %1707 = vdwg.mxu0
        %v1708 = vadd.f32 %v1612, %v1661
        %v1709 = vadd.f32 %v1613, %v1664
        %v1710 = vadd.f32 %v1614, %v1667
        %v1711 = vadd.f32 %v1615, %v1670
        %v1712 = vadd.f32 %v1616, %v1673
        %v1713 = vadd.f32 %v1617, %v1676
        %v1714 = vadd.f32 %v1618, %v1679
        %v1715 = vadd.f32 %v1619, %v1682
        %v1716 = vadd.f32 %v1620, %v1685
        %v1717 = vadd.f32 %v1621, %v1688
        %v1718 = vadd.f32 %v1622, %v1691
        %v1719 = vadd.f32 %v1623, %v1694
        %v1720 = vadd.f32 %v1624, %v1697
        %v1721 = vadd.f32 %v1625, %v1700
        %v1722 = vadd.f32 %v1626, %v1703
        %v1723 = vadd.f32 %v1627, %v1706
        %s1724 = scalar_lea.vmem %s330, 256 [#allocation2]
        %1725 = vst.msk [vmem:[%s1724] sm:$0xff] %vm416, %v1708
        %1726 = vst.msk [vmem:[%s1724 + $0x8] sm:$0xff] %vm416, %v1709
        %1727 = vst.msk [vmem:[%s1724 + $0x10] sm:$0xff] %vm416, %v1710
        %1728 = vst.msk [vmem:[%s1724 + $0x18] sm:$0xff] %vm416, %v1711
        %1729 = vst.msk [vmem:[%s1724 + $0x20] sm:$0xff] %vm416, %v1712
        %1730 = vst.msk [vmem:[%s1724 + $0x28] sm:$0xff] %vm416, %v1713
        %1731 = vst.msk [vmem:[%s1724 + $0x30] sm:$0xff] %vm416, %v1714
        %1732 = vst.msk [vmem:[%s1724 + $0x38] sm:$0xff] %vm416, %v1715
        %1733 = vst.msk [vmem:[%s1724 + $0x40] sm:$0xff] %vm416, %v1716
        %1734 = vst.msk [vmem:[%s1724 + $0x48] sm:$0xff] %vm416, %v1717
        %1735 = vst.msk [vmem:[%s1724 + $0x50] sm:$0xff] %vm416, %v1718
        %1736 = vst.msk [vmem:[%s1724 + $0x58] sm:$0xff] %vm416, %v1719
        %1737 = vst.msk [vmem:[%s1724 + $0x60] sm:$0xff] %vm416, %v1720
        %1738 = vst.msk [vmem:[%s1724 + $0x68] sm:$0xff] %vm416, %v1721
        %1739 = vst.msk [vmem:[%s1724 + $0x70] sm:$0xff] %vm416, %v1722
        %1740 = vst.msk [vmem:[%s1724 + $0x78] sm:$0xff] %vm416, %v1723
        %s1741 = scalar_lea.vmem %s3, 48
        %v1742 = vld [vmem:[%s1741] sm:$0xf]
        %v1744 = vsel %vm465, %v1742, 0
        %1746 = vmatpush.msra.mxu0 0.0
        %1747 = vmatpush.msra.mxu0 0.0
        %1748 = vmatpush.msra.mxu0 0.0
        %1749 = vmatpush.msra.mxu0 0.0
        %1750 = vmatpush.msra.mxu0 0.0
        %1751 = vmatpush.msra.mxu0 0.0
        %1752 = vmatpush.msra.mxu0 0.0
        %1753 = vmatpush.msra.mxu0 0.0
        %1754 = vmatpush.msra.mxu0 0.0
        %1755 = vmatpush.msra.mxu0 0.0
        %1756 = vmatpush.msra.mxu0 0.0
        %1757 = vmatpush.msra.mxu0 0.0
        %1758 = vmatpush.msra.mxu0 0.0
        %1759 = vmatpush.msra.mxu0 0.0
        %1760 = vmatpush.msra.mxu0 0.0
        %1761 = vmatpush.msra.mxu0 %v1744
        %1762 = vmatmul.f32.gmra.mxu0 %v605
        %v1763 = vpop.f32.mrf.mxu0
        %v1764 = vadd.f32 0.0, %v1763
        %1765 = vmatmul.f32.gmra.mxu0 %v607
        %v1766 = vpop.f32.mrf.mxu0
        %v1767 = vadd.f32 0.0, %v1766
        %1768 = vmatmul.f32.gmra.mxu0 %v609
        %v1769 = vpop.f32.mrf.mxu0
        %v1770 = vadd.f32 0.0, %v1769
        %1771 = vmatmul.f32.gmra.mxu0 %v611
        %v1772 = vpop.f32.mrf.mxu0
        %v1773 = vadd.f32 0.0, %v1772
        %1774 = vmatmul.f32.gmra.mxu0 %v613
        %v1775 = vpop.f32.mrf.mxu0
        %v1776 = vadd.f32 0.0, %v1775
        %1777 = vmatmul.f32.gmra.mxu0 %v615
        %v1778 = vpop.f32.mrf.mxu0
        %v1779 = vadd.f32 0.0, %v1778
        %1780 = vmatmul.f32.gmra.mxu0 %v617
        %v1781 = vpop.f32.mrf.mxu0
        %v1782 = vadd.f32 0.0, %v1781
        %1783 = vmatmul.f32.gmra.mxu0 %v619
        %v1784 = vpop.f32.mrf.mxu0
        %v1785 = vadd.f32 0.0, %v1784
        %1786 = vmatmul.f32.gmra.mxu0 %v621
        %v1787 = vpop.f32.mrf.mxu0
        %v1788 = vadd.f32 0.0, %v1787
        %1789 = vmatmul.f32.gmra.mxu0 %v623
        %v1790 = vpop.f32.mrf.mxu0
        %v1791 = vadd.f32 0.0, %v1790
        %1792 = vmatmul.f32.gmra.mxu0 %v625
        %v1793 = vpop.f32.mrf.mxu0
        %v1794 = vadd.f32 0.0, %v1793
        %1795 = vmatmul.f32.gmra.mxu0 %v627
        %v1796 = vpop.f32.mrf.mxu0
        %v1797 = vadd.f32 0.0, %v1796
        %1798 = vmatmul.f32.gmra.mxu0 %v629
        %v1799 = vpop.f32.mrf.mxu0
        %v1800 = vadd.f32 0.0, %v1799
        %1801 = vmatmul.f32.gmra.mxu0 %v631
        %v1802 = vpop.f32.mrf.mxu0
        %v1803 = vadd.f32 0.0, %v1802
        %1804 = vmatmul.f32.gmra.mxu0 %v817
        %v1805 = vpop.f32.mrf.mxu0
        %v1806 = vadd.f32 0.0, %v1805
        %1807 = vmatmul.f32.gmra.mxu0 %v819
        %v1808 = vpop.f32.mrf.mxu0
        %v1809 = vadd.f32 0.0, %v1808
        %1810 = vdwg.mxu0
        %v1811 = vadd.f32 %v413, %v1764
        %v1812 = vadd.f32 %v413, %v1767
        %v1813 = vadd.f32 %v413, %v1770
        %v1814 = vadd.f32 %v413, %v1773
        %v1815 = vadd.f32 %v413, %v1776
        %v1816 = vadd.f32 %v413, %v1779
        %v1817 = vadd.f32 %v413, %v1782
        %v1818 = vadd.f32 %v413, %v1785
        %v1819 = vadd.f32 %v413, %v1788
        %v1820 = vadd.f32 %v413, %v1791
        %v1821 = vadd.f32 %v413, %v1794
        %v1822 = vadd.f32 %v413, %v1797
        %v1823 = vadd.f32 %v413, %v1800
        %v1824 = vadd.f32 %v413, %v1803
        %v1825 = vadd.f32 %v413, %v1806
        %v1826 = vadd.f32 %v413, %v1809
        %s1827 = scalar_lea.vmem %s3, 52
        %v1828 = vld [vmem:[%s1827] sm:$0xf]
        %v1830 = vsel %vm465, %v1828, 0
        %1832 = vmatpush.msra.mxu0 0.0
        %1833 = vmatpush.msra.mxu0 0.0
        %1834 = vmatpush.msra.mxu0 0.0
        %1835 = vmatpush.msra.mxu0 0.0
        %1836 = vmatpush.msra.mxu0 0.0
        %1837 = vmatpush.msra.mxu0 0.0
        %1838 = vmatpush.msra.mxu0 0.0
        %1839 = vmatpush.msra.mxu0 0.0
        %1840 = vmatpush.msra.mxu0 0.0
        %1841 = vmatpush.msra.mxu0 0.0
        %1842 = vmatpush.msra.mxu0 0.0
        %1843 = vmatpush.msra.mxu0 0.0
        %1844 = vmatpush.msra.mxu0 0.0
        %1845 = vmatpush.msra.mxu0 0.0
        %1846 = vmatpush.msra.mxu0 0.0
        %1847 = vmatpush.msra.mxu0 %v1830
        %1848 = vmatmul.f32.gmra.mxu0 %v1054
        %v1849 = vpop.f32.mrf.mxu0
        %v1850 = vadd.f32 0.0, %v1849
        %1851 = vmatmul.f32.gmra.mxu0 %v1056
        %v1852 = vpop.f32.mrf.mxu0
        %v1853 = vadd.f32 0.0, %v1852
        %1854 = vmatmul.f32.gmra.mxu0 %v1058
        %v1855 = vpop.f32.mrf.mxu0
        %v1856 = vadd.f32 0.0, %v1855
        %1857 = vmatmul.f32.gmra.mxu0 %v1060
        %v1858 = vpop.f32.mrf.mxu0
        %v1859 = vadd.f32 0.0, %v1858
        %1860 = vmatmul.f32.gmra.mxu0 %v1062
        %v1861 = vpop.f32.mrf.mxu0
        %v1862 = vadd.f32 0.0, %v1861
        %1863 = vmatmul.f32.gmra.mxu0 %v1064
        %v1864 = vpop.f32.mrf.mxu0
        %v1865 = vadd.f32 0.0, %v1864
        %1866 = vmatmul.f32.gmra.mxu0 %v1066
        %v1867 = vpop.f32.mrf.mxu0
        %v1868 = vadd.f32 0.0, %v1867
        %1869 = vmatmul.f32.gmra.mxu0 %v1068
        %v1870 = vpop.f32.mrf.mxu0
        %v1871 = vadd.f32 0.0, %v1870
        %1872 = vmatmul.f32.gmra.mxu0 %v1070
        %v1873 = vpop.f32.mrf.mxu0
        %v1874 = vadd.f32 0.0, %v1873
        %1875 = vmatmul.f32.gmra.mxu0 %v1072
        %v1876 = vpop.f32.mrf.mxu0
        %v1877 = vadd.f32 0.0, %v1876
        %1878 = vmatmul.f32.gmra.mxu0 %v1074
        %v1879 = vpop.f32.mrf.mxu0
        %v1880 = vadd.f32 0.0, %v1879
        %1881 = vmatmul.f32.gmra.mxu0 %v1076
        %v1882 = vpop.f32.mrf.mxu0
        %v1883 = vadd.f32 0.0, %v1882
        %1884 = vmatmul.f32.gmra.mxu0 %v1078
        %v1885 = vpop.f32.mrf.mxu0
        %v1886 = vadd.f32 0.0, %v1885
        %1887 = vmatmul.f32.gmra.mxu0 %v1080
        %v1888 = vpop.f32.mrf.mxu0
        %v1889 = vadd.f32 0.0, %v1888
        %1890 = vmatmul.f32.gmra.mxu0 %v1259
        %v1891 = vpop.f32.mrf.mxu0
        %v1892 = vadd.f32 0.0, %v1891
        %1893 = vmatmul.f32.gmra.mxu0 %v1261
        %v1894 = vpop.f32.mrf.mxu0
        %v1895 = vadd.f32 0.0, %v1894
        %1896 = vdwg.mxu0
        %v1897 = vadd.f32 %v1811, %v1850
        %v1898 = vadd.f32 %v1812, %v1853
        %v1899 = vadd.f32 %v1813, %v1856
        %v1900 = vadd.f32 %v1814, %v1859
        %v1901 = vadd.f32 %v1815, %v1862
        %v1902 = vadd.f32 %v1816, %v1865
        %v1903 = vadd.f32 %v1817, %v1868
        %v1904 = vadd.f32 %v1818, %v1871
        %v1905 = vadd.f32 %v1819, %v1874
        %v1906 = vadd.f32 %v1820, %v1877
        %v1907 = vadd.f32 %v1821, %v1880
        %v1908 = vadd.f32 %v1822, %v1883
        %v1909 = vadd.f32 %v1823, %v1886
        %v1910 = vadd.f32 %v1824, %v1889
        %v1911 = vadd.f32 %v1825, %v1892
        %v1912 = vadd.f32 %v1826, %v1895
        %s1913 = scalar_lea.vmem %s3, 56
        %v1914 = vld [vmem:[%s1913] sm:$0xf]
        %v1916 = vsel %vm465, %v1914, 0
        %1918 = vmatpush.msra.mxu0 0.0
        %1919 = vmatpush.msra.mxu0 0.0
        %1920 = vmatpush.msra.mxu0 0.0
        %1921 = vmatpush.msra.mxu0 0.0
        %1922 = vmatpush.msra.mxu0 0.0
        %1923 = vmatpush.msra.mxu0 0.0
        %1924 = vmatpush.msra.mxu0 0.0
        %1925 = vmatpush.msra.mxu0 0.0
        %1926 = vmatpush.msra.mxu0 0.0
        %1927 = vmatpush.msra.mxu0 0.0
        %1928 = vmatpush.msra.mxu0 0.0
        %1929 = vmatpush.msra.mxu0 0.0
        %1930 = vmatpush.msra.mxu0 0.0
        %1931 = vmatpush.msra.mxu0 0.0
        %1932 = vmatpush.msra.mxu0 0.0
        %1933 = vmatpush.msra.mxu0 %v1916
        %1934 = vmatmul.f32.gmra.mxu0 %v609
        %v1935 = vpop.f32.mrf.mxu0
        %v1936 = vadd.f32 0.0, %v1935
        %1937 = vmatmul.f32.gmra.mxu0 %v611
        %v1938 = vpop.f32.mrf.mxu0
        %v1939 = vadd.f32 0.0, %v1938
        %1940 = vmatmul.f32.gmra.mxu0 %v613
        %v1941 = vpop.f32.mrf.mxu0
        %v1942 = vadd.f32 0.0, %v1941
        %1943 = vmatmul.f32.gmra.mxu0 %v615
        %v1944 = vpop.f32.mrf.mxu0
        %v1945 = vadd.f32 0.0, %v1944
        %1946 = vmatmul.f32.gmra.mxu0 %v617
        %v1947 = vpop.f32.mrf.mxu0
        %v1948 = vadd.f32 0.0, %v1947
        %1949 = vmatmul.f32.gmra.mxu0 %v619
        %v1950 = vpop.f32.mrf.mxu0
        %v1951 = vadd.f32 0.0, %v1950
        %1952 = vmatmul.f32.gmra.mxu0 %v621
        %v1953 = vpop.f32.mrf.mxu0
        %v1954 = vadd.f32 0.0, %v1953
        %1955 = vmatmul.f32.gmra.mxu0 %v623
        %v1956 = vpop.f32.mrf.mxu0
        %v1957 = vadd.f32 0.0, %v1956
        %1958 = vmatmul.f32.gmra.mxu0 %v625
        %v1959 = vpop.f32.mrf.mxu0
        %v1960 = vadd.f32 0.0, %v1959
        %1961 = vmatmul.f32.gmra.mxu0 %v627
        %v1962 = vpop.f32.mrf.mxu0
        %v1963 = vadd.f32 0.0, %v1962
        %1964 = vmatmul.f32.gmra.mxu0 %v629
        %v1965 = vpop.f32.mrf.mxu0
        %v1966 = vadd.f32 0.0, %v1965
        %1967 = vmatmul.f32.gmra.mxu0 %v631
        %v1968 = vpop.f32.mrf.mxu0
        %v1969 = vadd.f32 0.0, %v1968
        %1970 = vmatmul.f32.gmra.mxu0 %v817
        %v1971 = vpop.f32.mrf.mxu0
        %v1972 = vadd.f32 0.0, %v1971
        %1973 = vmatmul.f32.gmra.mxu0 %v819
        %v1974 = vpop.f32.mrf.mxu0
        %v1975 = vadd.f32 0.0, %v1974
        %1976 = vmatmul.f32.gmra.mxu0 %v1636
        %v1977 = vpop.f32.mrf.mxu0
        %v1978 = vadd.f32 0.0, %v1977
        %1979 = vmatmul.f32.gmra.mxu0 %v1638
        %v1980 = vpop.f32.mrf.mxu0
        %v1981 = vadd.f32 0.0, %v1980
        %1982 = vdwg.mxu0
        %v1983 = vadd.f32 %v1897, %v1936
        %v1984 = vadd.f32 %v1898, %v1939
        %v1985 = vadd.f32 %v1899, %v1942
        %v1986 = vadd.f32 %v1900, %v1945
        %v1987 = vadd.f32 %v1901, %v1948
        %v1988 = vadd.f32 %v1902, %v1951
        %v1989 = vadd.f32 %v1903, %v1954
        %v1990 = vadd.f32 %v1904, %v1957
        %v1991 = vadd.f32 %v1905, %v1960
        %v1992 = vadd.f32 %v1906, %v1963
        %v1993 = vadd.f32 %v1907, %v1966
        %v1994 = vadd.f32 %v1908, %v1969
        %v1995 = vadd.f32 %v1909, %v1972
        %v1996 = vadd.f32 %v1910, %v1975
        %v1997 = vadd.f32 %v1911, %v1978
        %v1998 = vadd.f32 %v1912, %v1981
        %v1999 = vrot.slane %v408, 2
        %v2000 = vrot.slane %v409, 2
        %v2001 = vsel %vm1007, %v1999, %v2000
        %v2002 = vrot.slane %v410, 2
        %v2003 = vsel %vm1007, %v2000, %v2002
        %s2004 = scalar_lea.vmem %s3, 60
        %v2005 = vld [vmem:[%s2004] sm:$0xf]
        %v2006 = vsel %vm416, %v2001, 0
        %v2008 = vsel %vm416, %v2003, 0
        %v2011 = vsel %vm465, %v2005, 0
        %2013 = vmatpush.msra.mxu0 0.0
        %2014 = vmatpush.msra.mxu0 0.0
        %2015 = vmatpush.msra.mxu0 0.0
        %2016 = vmatpush.msra.mxu0 0.0
        %2017 = vmatpush.msra.mxu0 0.0
        %2018 = vmatpush.msra.mxu0 0.0
        %2019 = vmatpush.msra.mxu0 0.0
        %2020 = vmatpush.msra.mxu0 0.0
        %2021 = vmatpush.msra.mxu0 0.0
        %2022 = vmatpush.msra.mxu0 0.0
        %2023 = vmatpush.msra.mxu0 0.0
        %2024 = vmatpush.msra.mxu0 0.0
        %2025 = vmatpush.msra.mxu0 0.0
        %2026 = vmatpush.msra.mxu0 0.0
        %2027 = vmatpush.msra.mxu0 0.0
        %2028 = vmatpush.msra.mxu0 %v2011
        %2029 = vmatmul.f32.gmra.mxu0 %v1058
        %v2030 = vpop.f32.mrf.mxu0
        %v2031 = vadd.f32 0.0, %v2030
        %2032 = vmatmul.f32.gmra.mxu0 %v1060
        %v2033 = vpop.f32.mrf.mxu0
        %v2034 = vadd.f32 0.0, %v2033
        %2035 = vmatmul.f32.gmra.mxu0 %v1062
        %v2036 = vpop.f32.mrf.mxu0
        %v2037 = vadd.f32 0.0, %v2036
        %2038 = vmatmul.f32.gmra.mxu0 %v1064
        %v2039 = vpop.f32.mrf.mxu0
        %v2040 = vadd.f32 0.0, %v2039
        %2041 = vmatmul.f32.gmra.mxu0 %v1066
        %v2042 = vpop.f32.mrf.mxu0
        %v2043 = vadd.f32 0.0, %v2042
        %2044 = vmatmul.f32.gmra.mxu0 %v1068
        %v2045 = vpop.f32.mrf.mxu0
        %v2046 = vadd.f32 0.0, %v2045
        %2047 = vmatmul.f32.gmra.mxu0 %v1070
        %v2048 = vpop.f32.mrf.mxu0
        %v2049 = vadd.f32 0.0, %v2048
        %2050 = vmatmul.f32.gmra.mxu0 %v1072
        %v2051 = vpop.f32.mrf.mxu0
        %v2052 = vadd.f32 0.0, %v2051
        %2053 = vmatmul.f32.gmra.mxu0 %v1074
        %v2054 = vpop.f32.mrf.mxu0
        %v2055 = vadd.f32 0.0, %v2054
        %2056 = vmatmul.f32.gmra.mxu0 %v1076
        %v2057 = vpop.f32.mrf.mxu0
        %v2058 = vadd.f32 0.0, %v2057
        %2059 = vmatmul.f32.gmra.mxu0 %v1078
        %v2060 = vpop.f32.mrf.mxu0
        %v2061 = vadd.f32 0.0, %v2060
        %2062 = vmatmul.f32.gmra.mxu0 %v1080
        %v2063 = vpop.f32.mrf.mxu0
        %v2064 = vadd.f32 0.0, %v2063
        %2065 = vmatmul.f32.gmra.mxu0 %v1259
        %v2066 = vpop.f32.mrf.mxu0
        %v2067 = vadd.f32 0.0, %v2066
        %2068 = vmatmul.f32.gmra.mxu0 %v1261
        %v2069 = vpop.f32.mrf.mxu0
        %v2070 = vadd.f32 0.0, %v2069
        %2071 = vmatmul.f32.gmra.mxu0 %v2006
        %v2072 = vpop.f32.mrf.mxu0
        %v2073 = vadd.f32 0.0, %v2072
        %2074 = vmatmul.f32.gmra.mxu0 %v2008
        %v2075 = vpop.f32.mrf.mxu0
        %v2076 = vadd.f32 0.0, %v2075
        %2077 = vdwg.mxu0
        %v2078 = vadd.f32 %v1983, %v2031
        %v2079 = vadd.f32 %v1984, %v2034
        %v2080 = vadd.f32 %v1985, %v2037
        %v2081 = vadd.f32 %v1986, %v2040
        %v2082 = vadd.f32 %v1987, %v2043
        %v2083 = vadd.f32 %v1988, %v2046
        %v2084 = vadd.f32 %v1989, %v2049
        %v2085 = vadd.f32 %v1990, %v2052
        %v2086 = vadd.f32 %v1991, %v2055
        %v2087 = vadd.f32 %v1992, %v2058
        %v2088 = vadd.f32 %v1993, %v2061
        %v2089 = vadd.f32 %v1994, %v2064
        %v2090 = vadd.f32 %v1995, %v2067
        %v2091 = vadd.f32 %v1996, %v2070
        %v2092 = vadd.f32 %v1997, %v2073
        %v2093 = vadd.f32 %v1998, %v2076
        %s2094 = scalar_lea.vmem %s330, 384 [#allocation2]
        %2095 = vst.msk [vmem:[%s2094] sm:$0xff] %vm416, %v2078
        %2096 = vst.msk [vmem:[%s2094 + $0x8] sm:$0xff] %vm416, %v2079
        %2097 = vst.msk [vmem:[%s2094 + $0x10] sm:$0xff] %vm416, %v2080
        %2098 = vst.msk [vmem:[%s2094 + $0x18] sm:$0xff] %vm416, %v2081
        %2099 = vst.msk [vmem:[%s2094 + $0x20] sm:$0xff] %vm416, %v2082
        %2100 = vst.msk [vmem:[%s2094 + $0x28] sm:$0xff] %vm416, %v2083
        %2101 = vst.msk [vmem:[%s2094 + $0x30] sm:$0xff] %vm416, %v2084
        %2102 = vst.msk [vmem:[%s2094 + $0x38] sm:$0xff] %vm416, %v2085
        %2103 = vst.msk [vmem:[%s2094 + $0x40] sm:$0xff] %vm416, %v2086
        %2104 = vst.msk [vmem:[%s2094 + $0x48] sm:$0xff] %vm416, %v2087
        %2105 = vst.msk [vmem:[%s2094 + $0x50] sm:$0xff] %vm416, %v2088
        %2106 = vst.msk [vmem:[%s2094 + $0x58] sm:$0xff] %vm416, %v2089
        %2107 = vst.msk [vmem:[%s2094 + $0x60] sm:$0xff] %vm416, %v2090
        %2108 = vst.msk [vmem:[%s2094 + $0x68] sm:$0xff] %vm416, %v2091
        %2109 = vst.msk [vmem:[%s2094 + $0x70] sm:$0xff] %vm416, %v2092
        %2110 = vst.msk [vmem:[%s2094 + $0x78] sm:$0xff] %vm416, %v2093
        %s2111 = sand.u32 %s174, 1
        %s2112 = sand.u32 %s174, 1
        %s2113 = smul.addr %s2112, 512
        %s2114 = scalar_lea.vmem [#allocation2], %s2113
        // Predicated region
        $region41: #{tpu_custom_call.1} parent=39 // pred_check
          %p2115 = pneg %p184
        $region42: #{tpu_custom_call.1} parent=39 // pred_check_branch
          %2117 = sbr.rel (%p2115) target = $region44
        $region43: #{tpu_custom_call.1} parent=39 // pred_region
          %s2118 = smul.u32 8, %s21
          %s2119 = smul.addr %s2118, 2
          %s2120 = smul.addr %s20, 128
          %s2121 = sadd.s32 %s2119, %s2120
          %s2122 = smul.addr %s2121, 8
          %s2123 = scalar_lea.vmem %s5, %s2122
          // Predicated region
          $region45: #{tpu_custom_call.1} parent=43 // pred_check
            _
          $region46: #{tpu_custom_call.1} parent=43 // pred_check_branch
            %2125 = sbr.rel (0) target = $region48
          $region47: #{tpu_custom_call.1} parent=43 // pred_region
            // Predicated region
            $region49: #{tpu_custom_call.1} parent=47 // pred_check
              _
            $region50: #{tpu_custom_call.1} parent=47 // pred_check_branch
              %2127 = sbr.rel (0) target = $region52
            $region51: #{tpu_custom_call.1} parent=47 // pred_region
              // Predicated region
              $region64: #{tpu_custom_call.1} parent=51 // pred_check
                _
              $region65: #{tpu_custom_call.1} parent=51 // pred_check_branch
                %2269 = sbr.rel (0) target = $region67
              $region66: #{tpu_custom_call.1} parent=51 // pred_region
                loop: start=0, step=1, limit=1
                $region68: #{tpu_custom_call.1} parent=66 // loop_pre_header
                  _
                $region69: #{tpu_custom_call.1} parent=66 // loop_header
                  %s2271 = sphi 0, %s2275
                  %p2272 = scmp.ge.s32.totalorder %s2271, 1
                  %s2276 = sphi %s2114, %s2114
                  %s2277 = sphi %s2123, %s2123
                $region70: #{tpu_custom_call.1} parent=66 // loop_header_branch
                  %2274 = sbr.rel (%p2272) target = $region74
                $region71: #{tpu_custom_call.1} parent=66 // loop_body
                  %v2278 = vld [vmem:[%s2276] sm:$0xff]
                  %2279 = vst [vmem:[%s2277] sm:$0xff] %v2278
                  %v2280 = vld [vmem:[%s2276 + $0x8] sm:$0xff]
                  %2281 = vst [vmem:[%s2277 + $0x8] sm:$0xff] %v2280
                  %v2282 = vld [vmem:[%s2276 + $0x10] sm:$0xff]
                  %2283 = vst [vmem:[%s2277 + $0x10] sm:$0xff] %v2282
                  %v2284 = vld [vmem:[%s2276 + $0x18] sm:$0xff]
                  %2285 = vst [vmem:[%s2277 + $0x18] sm:$0xff] %v2284
                  %v2286 = vld [vmem:[%s2276 + $0x20] sm:$0xff]
                  %2287 = vst [vmem:[%s2277 + $0x20] sm:$0xff] %v2286
                  %v2288 = vld [vmem:[%s2276 + $0x28] sm:$0xff]
                  %2289 = vst [vmem:[%s2277 + $0x28] sm:$0xff] %v2288
                  %v2290 = vld [vmem:[%s2276 + $0x30] sm:$0xff]
                  %2291 = vst [vmem:[%s2277 + $0x30] sm:$0xff] %v2290
                  %v2292 = vld [vmem:[%s2276 + $0x38] sm:$0xff]
                  %2293 = vst [vmem:[%s2277 + $0x38] sm:$0xff] %v2292
                  %v2294 = vld [vmem:[%s2276 + $0x40] sm:$0xff]
                  %2295 = vst [vmem:[%s2277 + $0x40] sm:$0xff] %v2294
                  %v2296 = vld [vmem:[%s2276 + $0x48] sm:$0xff]
                  %2297 = vst [vmem:[%s2277 + $0x48] sm:$0xff] %v2296
                  %v2298 = vld [vmem:[%s2276 + $0x50] sm:$0xff]
                  %2299 = vst [vmem:[%s2277 + $0x50] sm:$0xff] %v2298
                  %v2300 = vld [vmem:[%s2276 + $0x58] sm:$0xff]
                  %2301 = vst [vmem:[%s2277 + $0x58] sm:$0xff] %v2300
                  %v2302 = vld [vmem:[%s2276 + $0x60] sm:$0xff]
                  %2303 = vst [vmem:[%s2277 + $0x60] sm:$0xff] %v2302
                  %v2304 = vld [vmem:[%s2276 + $0x68] sm:$0xff]
                  %2305 = vst [vmem:[%s2277 + $0x68] sm:$0xff] %v2304
                  %v2306 = vld [vmem:[%s2276 + $0x70] sm:$0xff]
                  %2307 = vst [vmem:[%s2277 + $0x70] sm:$0xff] %v2306
                  %v2308 = vld [vmem:[%s2276 + $0x78] sm:$0xff]
                  %2309 = vst [vmem:[%s2277 + $0x78] sm:$0xff] %v2308
                  %v2310 = vld [vmem:[%s2276 + $0x80] sm:$0xff]
                  %2311 = vst [vmem:[%s2277 + $0x100] sm:$0xff] %v2310
                  %v2312 = vld [vmem:[%s2276 + $0x88] sm:$0xff]
                  %2313 = vst [vmem:[%s2277 + $0x108] sm:$0xff] %v2312
                  %v2314 = vld [vmem:[%s2276 + $0x90] sm:$0xff]
                  %2315 = vst [vmem:[%s2277 + $0x110] sm:$0xff] %v2314
                  %v2316 = vld [vmem:[%s2276 + $0x98] sm:$0xff]
                  %2317 = vst [vmem:[%s2277 + $0x118] sm:$0xff] %v2316
                  %v2318 = vld [vmem:[%s2276 + $0xa0] sm:$0xff]
                  %2319 = vst [vmem:[%s2277 + $0x120] sm:$0xff] %v2318
                  %v2320 = vld [vmem:[%s2276 + $0xa8] sm:$0xff]
                  %2321 = vst [vmem:[%s2277 + $0x128] sm:$0xff] %v2320
                  %v2322 = vld [vmem:[%s2276 + $0xb0] sm:$0xff]
                  %2323 = vst [vmem:[%s2277 + $0x130] sm:$0xff] %v2322
                  %v2324 = vld [vmem:[%s2276 + $0xb8] sm:$0xff]
                  %2325 = vst [vmem:[%s2277 + $0x138] sm:$0xff] %v2324
                  %v2326 = vld [vmem:[%s2276 + $0xc0] sm:$0xff]
                  %2327 = vst [vmem:[%s2277 + $0x140] sm:$0xff] %v2326
                  %v2328 = vld [vmem:[%s2276 + $0xc8] sm:$0xff]
                  %2329 = vst [vmem:[%s2277 + $0x148] sm:$0xff] %v2328
                  %v2330 = vld [vmem:[%s2276 + $0xd0] sm:$0xff]
                  %2331 = vst [vmem:[%s2277 + $0x150] sm:$0xff] %v2330
                  %v2332 = vld [vmem:[%s2276 + $0xd8] sm:$0xff]
                  %2333 = vst [vmem:[%s2277 + $0x158] sm:$0xff] %v2332
                  %v2334 = vld [vmem:[%s2276 + $0xe0] sm:$0xff]
                  %2335 = vst [vmem:[%s2277 + $0x160] sm:$0xff] %v2334
                  %v2336 = vld [vmem:[%s2276 + $0xe8] sm:$0xff]
                  %2337 = vst [vmem:[%s2277 + $0x168] sm:$0xff] %v2336
                  %v2338 = vld [vmem:[%s2276 + $0xf0] sm:$0xff]
                  %2339 = vst [vmem:[%s2277 + $0x170] sm:$0xff] %v2338
                  %v2340 = vld [vmem:[%s2276 + $0xf8] sm:$0xff]
                  %2341 = vst [vmem:[%s2277 + $0x178] sm:$0xff] %v2340
                  %v2342 = vld [vmem:[%s2276 + $0x100] sm:$0xff]
                  %2343 = vst [vmem:[%s2277 + $0x200] sm:$0xff] %v2342
                  %v2344 = vld [vmem:[%s2276 + $0x108] sm:$0xff]
                  %2345 = vst [vmem:[%s2277 + $0x208] sm:$0xff] %v2344
                  %v2346 = vld [vmem:[%s2276 + $0x110] sm:$0xff]
                  %2347 = vst [vmem:[%s2277 + $0x210] sm:$0xff] %v2346
                  %v2348 = vld [vmem:[%s2276 + $0x118] sm:$0xff]
                  %2349 = vst [vmem:[%s2277 + $0x218] sm:$0xff] %v2348
                  %v2350 = vld [vmem:[%s2276 + $0x120] sm:$0xff]
                  %2351 = vst [vmem:[%s2277 + $0x220] sm:$0xff] %v2350
                  %v2352 = vld [vmem:[%s2276 + $0x128] sm:$0xff]
                  %2353 = vst [vmem:[%s2277 + $0x228] sm:$0xff] %v2352
                  %v2354 = vld [vmem:[%s2276 + $0x130] sm:$0xff]
                  %2355 = vst [vmem:[%s2277 + $0x230] sm:$0xff] %v2354
                  %v2356 = vld [vmem:[%s2276 + $0x138] sm:$0xff]
                  %2357 = vst [vmem:[%s2277 + $0x238] sm:$0xff] %v2356
                  %v2358 = vld [vmem:[%s2276 + $0x140] sm:$0xff]
                  %2359 = vst [vmem:[%s2277 + $0x240] sm:$0xff] %v2358
                  %v2360 = vld [vmem:[%s2276 + $0x148] sm:$0xff]
                  %2361 = vst [vmem:[%s2277 + $0x248] sm:$0xff] %v2360
                  %v2362 = vld [vmem:[%s2276 + $0x150] sm:$0xff]
                  %2363 = vst [vmem:[%s2277 + $0x250] sm:$0xff] %v2362
                  %v2364 = vld [vmem:[%s2276 + $0x158] sm:$0xff]
                  %2365 = vst [vmem:[%s2277 + $0x258] sm:$0xff] %v2364
                  %v2366 = vld [vmem:[%s2276 + $0x160] sm:$0xff]
                  %2367 = vst [vmem:[%s2277 + $0x260] sm:$0xff] %v2366
                  %v2368 = vld [vmem:[%s2276 + $0x168] sm:$0xff]
                  %2369 = vst [vmem:[%s2277 + $0x268] sm:$0xff] %v2368
                  %v2370 = vld [vmem:[%s2276 + $0x170] sm:$0xff]
                  %2371 = vst [vmem:[%s2277 + $0x270] sm:$0xff] %v2370
                  %v2372 = vld [vmem:[%s2276 + $0x178] sm:$0xff]
                  %2373 = vst [vmem:[%s2277 + $0x278] sm:$0xff] %v2372
                  %v2374 = vld [vmem:[%s2276 + $0x180] sm:$0xff]
                  %2375 = vst [vmem:[%s2277 + $0x300] sm:$0xff] %v2374
                  %v2376 = vld [vmem:[%s2276 + $0x188] sm:$0xff]
                  %2377 = vst [vmem:[%s2277 + $0x308] sm:$0xff] %v2376
                  %v2378 = vld [vmem:[%s2276 + $0x190] sm:$0xff]
                  %2379 = vst [vmem:[%s2277 + $0x310] sm:$0xff] %v2378
                  %v2380 = vld [vmem:[%s2276 + $0x198] sm:$0xff]
                  %2381 = vst [vmem:[%s2277 + $0x318] sm:$0xff] %v2380
                  %v2382 = vld [vmem:[%s2276 + $0x1a0] sm:$0xff]
                  %2383 = vst [vmem:[%s2277 + $0x320] sm:$0xff] %v2382
                  %v2384 = vld [vmem:[%s2276 + $0x1a8] sm:$0xff]
                  %2385 = vst [vmem:[%s2277 + $0x328] sm:$0xff] %v2384
                  %v2386 = vld [vmem:[%s2276 + $0x1b0] sm:$0xff]
                  %2387 = vst [vmem:[%s2277 + $0x330] sm:$0xff] %v2386
                  %v2388 = vld [vmem:[%s2276 + $0x1b8] sm:$0xff]
                  %2389 = vst [vmem:[%s2277 + $0x338] sm:$0xff] %v2388
                  %v2390 = vld [vmem:[%s2276 + $0x1c0] sm:$0xff]
                  %2391 = vst [vmem:[%s2277 + $0x340] sm:$0xff] %v2390
                  %v2392 = vld [vmem:[%s2276 + $0x1c8] sm:$0xff]
                  %2393 = vst [vmem:[%s2277 + $0x348] sm:$0xff] %v2392
                  %v2394 = vld [vmem:[%s2276 + $0x1d0] sm:$0xff]
                  %2395 = vst [vmem:[%s2277 + $0x350] sm:$0xff] %v2394
                  %v2396 = vld [vmem:[%s2276 + $0x1d8] sm:$0xff]
                  %2397 = vst [vmem:[%s2277 + $0x358] sm:$0xff] %v2396
                  %v2398 = vld [vmem:[%s2276 + $0x1e0] sm:$0xff]
                  %2399 = vst [vmem:[%s2277 + $0x360] sm:$0xff] %v2398
                  %v2400 = vld [vmem:[%s2276 + $0x1e8] sm:$0xff]
                  %2401 = vst [vmem:[%s2277 + $0x368] sm:$0xff] %v2400
                  %v2402 = vld [vmem:[%s2276 + $0x1f0] sm:$0xff]
                  %2403 = vst [vmem:[%s2277 + $0x370] sm:$0xff] %v2402
                  %v2404 = vld [vmem:[%s2276 + $0x1f8] sm:$0xff]
                  %2405 = vst [vmem:[%s2277 + $0x378] sm:$0xff] %v2404
                $region72: #{tpu_custom_call.1} parent=66 // loop_footer
                  %s2275 = sadd.s32 1, %s2271
                $region73: #{tpu_custom_call.1} parent=66 // loop_footer_branch
                  %2270 = sbr.rel target = $region69
                $region74: #{tpu_custom_call.1} parent=66 // loop_exit
                  _
              $region67: #{tpu_custom_call.1} parent=51 // pred_fallthru
                _
              // Predicated region
              $region75: #{tpu_custom_call.1} parent=51 // pred_check
                _
              $region76: #{tpu_custom_call.1} parent=51 // pred_check_branch
                %2407 = sbr.rel target = $region78
              $region77: #{tpu_custom_call.1} parent=51 // pred_region
                _
              $region78: #{tpu_custom_call.1} parent=51 // pred_fallthru
                _
            $region52: #{tpu_custom_call.1} parent=47 // pred_fallthru
              _
            // Predicated region
            $region53: #{tpu_custom_call.1} parent=47 // pred_check
              _
            $region54: #{tpu_custom_call.1} parent=47 // pred_check_branch
              %2129 = sbr.rel target = $region56
            $region55: #{tpu_custom_call.1} parent=47 // pred_region
              %s2131 = ssub.s32 256, 1
              loop: start=0, step=1, limit=1
              $region57: #{tpu_custom_call.1} parent=55 // loop_pre_header
                _
              $region58: #{tpu_custom_call.1} parent=55 // loop_header
                %s2133 = sphi 0, %s2137
                %p2134 = scmp.ge.s32.totalorder %s2133, 1
                %s2138 = sphi %s2114, %s2114
                %s2139 = sphi %s2123, %s2123
              $region59: #{tpu_custom_call.1} parent=55 // loop_header_branch
                %2136 = sbr.rel (%p2134) target = $region63
              $region60: #{tpu_custom_call.1} parent=55 // loop_body
                %v2140 = vld [vmem:[%s2138] sm:%s2131]
                %2141 = vst [vmem:[%s2139] sm:%s2131] %v2140
                %v2142 = vld [vmem:[%s2138 + $0x8] sm:%s2131]
                %2143 = vst [vmem:[%s2139 + $0x8] sm:%s2131] %v2142
                %v2144 = vld [vmem:[%s2138 + $0x10] sm:%s2131]
                %2145 = vst [vmem:[%s2139 + $0x10] sm:%s2131] %v2144
                %v2146 = vld [vmem:[%s2138 + $0x18] sm:%s2131]
                %2147 = vst [vmem:[%s2139 + $0x18] sm:%s2131] %v2146
                %v2148 = vld [vmem:[%s2138 + $0x20] sm:%s2131]
                %2149 = vst [vmem:[%s2139 + $0x20] sm:%s2131] %v2148
                %v2150 = vld [vmem:[%s2138 + $0x28] sm:%s2131]
                %2151 = vst [vmem:[%s2139 + $0x28] sm:%s2131] %v2150
                %v2152 = vld [vmem:[%s2138 + $0x30] sm:%s2131]
                %2153 = vst [vmem:[%s2139 + $0x30] sm:%s2131] %v2152
                %v2154 = vld [vmem:[%s2138 + $0x38] sm:%s2131]
                %2155 = vst [vmem:[%s2139 + $0x38] sm:%s2131] %v2154
                %v2156 = vld [vmem:[%s2138 + $0x40] sm:%s2131]
                %2157 = vst [vmem:[%s2139 + $0x40] sm:%s2131] %v2156
                %v2158 = vld [vmem:[%s2138 + $0x48] sm:%s2131]
                %2159 = vst [vmem:[%s2139 + $0x48] sm:%s2131] %v2158
                %v2160 = vld [vmem:[%s2138 + $0x50] sm:%s2131]
                %2161 = vst [vmem:[%s2139 + $0x50] sm:%s2131] %v2160
                %v2162 = vld [vmem:[%s2138 + $0x58] sm:%s2131]
                %2163 = vst [vmem:[%s2139 + $0x58] sm:%s2131] %v2162
                %v2164 = vld [vmem:[%s2138 + $0x60] sm:%s2131]
                %2165 = vst [vmem:[%s2139 + $0x60] sm:%s2131] %v2164
                %v2166 = vld [vmem:[%s2138 + $0x68] sm:%s2131]
                %2167 = vst [vmem:[%s2139 + $0x68] sm:%s2131] %v2166
                %v2168 = vld [vmem:[%s2138 + $0x70] sm:%s2131]
                %2169 = vst [vmem:[%s2139 + $0x70] sm:%s2131] %v2168
                %v2170 = vld [vmem:[%s2138 + $0x78] sm:%s2131]
                %2171 = vst [vmem:[%s2139 + $0x78] sm:%s2131] %v2170
                %v2172 = vld [vmem:[%s2138 + $0x80] sm:%s2131]
                %2173 = vst [vmem:[%s2139 + $0x100] sm:%s2131] %v2172
                %v2174 = vld [vmem:[%s2138 + $0x88] sm:%s2131]
                %2175 = vst [vmem:[%s2139 + $0x108] sm:%s2131] %v2174
                %v2176 = vld [vmem:[%s2138 + $0x90] sm:%s2131]
                %2177 = vst [vmem:[%s2139 + $0x110] sm:%s2131] %v2176
                %v2178 = vld [vmem:[%s2138 + $0x98] sm:%s2131]
                %2179 = vst [vmem:[%s2139 + $0x118] sm:%s2131] %v2178
                %v2180 = vld [vmem:[%s2138 + $0xa0] sm:%s2131]
                %2181 = vst [vmem:[%s2139 + $0x120] sm:%s2131] %v2180
                %v2182 = vld [vmem:[%s2138 + $0xa8] sm:%s2131]
                %2183 = vst [vmem:[%s2139 + $0x128] sm:%s2131] %v2182
                %v2184 = vld [vmem:[%s2138 + $0xb0] sm:%s2131]
                %2185 = vst [vmem:[%s2139 + $0x130] sm:%s2131] %v2184
                %v2186 = vld [vmem:[%s2138 + $0xb8] sm:%s2131]
                %2187 = vst [vmem:[%s2139 + $0x138] sm:%s2131] %v2186
                %v2188 = vld [vmem:[%s2138 + $0xc0] sm:%s2131]
                %2189 = vst [vmem:[%s2139 + $0x140] sm:%s2131] %v2188
                %v2190 = vld [vmem:[%s2138 + $0xc8] sm:%s2131]
                %2191 = vst [vmem:[%s2139 + $0x148] sm:%s2131] %v2190
                %v2192 = vld [vmem:[%s2138 + $0xd0] sm:%s2131]
                %2193 = vst [vmem:[%s2139 + $0x150] sm:%s2131] %v2192
                %v2194 = vld [vmem:[%s2138 + $0xd8] sm:%s2131]
                %2195 = vst [vmem:[%s2139 + $0x158] sm:%s2131] %v2194
                %v2196 = vld [vmem:[%s2138 + $0xe0] sm:%s2131]
                %2197 = vst [vmem:[%s2139 + $0x160] sm:%s2131] %v2196
                %v2198 = vld [vmem:[%s2138 + $0xe8] sm:%s2131]
                %2199 = vst [vmem:[%s2139 + $0x168] sm:%s2131] %v2198
                %v2200 = vld [vmem:[%s2138 + $0xf0] sm:%s2131]
                %2201 = vst [vmem:[%s2139 + $0x170] sm:%s2131] %v2200
                %v2202 = vld [vmem:[%s2138 + $0xf8] sm:%s2131]
                %2203 = vst [vmem:[%s2139 + $0x178] sm:%s2131] %v2202
                %v2204 = vld [vmem:[%s2138 + $0x100] sm:%s2131]
                %2205 = vst [vmem:[%s2139 + $0x200] sm:%s2131] %v2204
                %v2206 = vld [vmem:[%s2138 + $0x108] sm:%s2131]
                %2207 = vst [vmem:[%s2139 + $0x208] sm:%s2131] %v2206
                %v2208 = vld [vmem:[%s2138 + $0x110] sm:%s2131]
                %2209 = vst [vmem:[%s2139 + $0x210] sm:%s2131] %v2208
                %v2210 = vld [vmem:[%s2138 + $0x118] sm:%s2131]
                %2211 = vst [vmem:[%s2139 + $0x218] sm:%s2131] %v2210
                %v2212 = vld [vmem:[%s2138 + $0x120] sm:%s2131]
                %2213 = vst [vmem:[%s2139 + $0x220] sm:%s2131] %v2212
                %v2214 = vld [vmem:[%s2138 + $0x128] sm:%s2131]
                %2215 = vst [vmem:[%s2139 + $0x228] sm:%s2131] %v2214
                %v2216 = vld [vmem:[%s2138 + $0x130] sm:%s2131]
                %2217 = vst [vmem:[%s2139 + $0x230] sm:%s2131] %v2216
                %v2218 = vld [vmem:[%s2138 + $0x138] sm:%s2131]
                %2219 = vst [vmem:[%s2139 + $0x238] sm:%s2131] %v2218
                %v2220 = vld [vmem:[%s2138 + $0x140] sm:%s2131]
                %2221 = vst [vmem:[%s2139 + $0x240] sm:%s2131] %v2220
                %v2222 = vld [vmem:[%s2138 + $0x148] sm:%s2131]
                %2223 = vst [vmem:[%s2139 + $0x248] sm:%s2131] %v2222
                %v2224 = vld [vmem:[%s2138 + $0x150] sm:%s2131]
                %2225 = vst [vmem:[%s2139 + $0x250] sm:%s2131] %v2224
                %v2226 = vld [vmem:[%s2138 + $0x158] sm:%s2131]
                %2227 = vst [vmem:[%s2139 + $0x258] sm:%s2131] %v2226
                %v2228 = vld [vmem:[%s2138 + $0x160] sm:%s2131]
                %2229 = vst [vmem:[%s2139 + $0x260] sm:%s2131] %v2228
                %v2230 = vld [vmem:[%s2138 + $0x168] sm:%s2131]
                %2231 = vst [vmem:[%s2139 + $0x268] sm:%s2131] %v2230
                %v2232 = vld [vmem:[%s2138 + $0x170] sm:%s2131]
                %2233 = vst [vmem:[%s2139 + $0x270] sm:%s2131] %v2232
                %v2234 = vld [vmem:[%s2138 + $0x178] sm:%s2131]
                %2235 = vst [vmem:[%s2139 + $0x278] sm:%s2131] %v2234
                %v2236 = vld [vmem:[%s2138 + $0x180] sm:%s2131]
                %2237 = vst [vmem:[%s2139 + $0x300] sm:%s2131] %v2236
                %v2238 = vld [vmem:[%s2138 + $0x188] sm:%s2131]
                %2239 = vst [vmem:[%s2139 + $0x308] sm:%s2131] %v2238
                %v2240 = vld [vmem:[%s2138 + $0x190] sm:%s2131]
                %2241 = vst [vmem:[%s2139 + $0x310] sm:%s2131] %v2240
                %v2242 = vld [vmem:[%s2138 + $0x198] sm:%s2131]
                %2243 = vst [vmem:[%s2139 + $0x318] sm:%s2131] %v2242
                %v2244 = vld [vmem:[%s2138 + $0x1a0] sm:%s2131]
                %2245 = vst [vmem:[%s2139 + $0x320] sm:%s2131] %v2244
                %v2246 = vld [vmem:[%s2138 + $0x1a8] sm:%s2131]
                %2247 = vst [vmem:[%s2139 + $0x328] sm:%s2131] %v2246
                %v2248 = vld [vmem:[%s2138 + $0x1b0] sm:%s2131]
                %2249 = vst [vmem:[%s2139 + $0x330] sm:%s2131] %v2248
                %v2250 = vld [vmem:[%s2138 + $0x1b8] sm:%s2131]
                %2251 = vst [vmem:[%s2139 + $0x338] sm:%s2131] %v2250
                %v2252 = vld [vmem:[%s2138 + $0x1c0] sm:%s2131]
                %2253 = vst [vmem:[%s2139 + $0x340] sm:%s2131] %v2252
                %v2254 = vld [vmem:[%s2138 + $0x1c8] sm:%s2131]
                %2255 = vst [vmem:[%s2139 + $0x348] sm:%s2131] %v2254
                %v2256 = vld [vmem:[%s2138 + $0x1d0] sm:%s2131]
                %2257 = vst [vmem:[%s2139 + $0x350] sm:%s2131] %v2256
                %v2258 = vld [vmem:[%s2138 + $0x1d8] sm:%s2131]
                %2259 = vst [vmem:[%s2139 + $0x358] sm:%s2131] %v2258
                %v2260 = vld [vmem:[%s2138 + $0x1e0] sm:%s2131]
                %2261 = vst [vmem:[%s2139 + $0x360] sm:%s2131] %v2260
                %v2262 = vld [vmem:[%s2138 + $0x1e8] sm:%s2131]
                %2263 = vst [vmem:[%s2139 + $0x368] sm:%s2131] %v2262
                %v2264 = vld [vmem:[%s2138 + $0x1f0] sm:%s2131]
                %2265 = vst [vmem:[%s2139 + $0x370] sm:%s2131] %v2264
                %v2266 = vld [vmem:[%s2138 + $0x1f8] sm:%s2131]
                %2267 = vst [vmem:[%s2139 + $0x378] sm:%s2131] %v2266
              $region61: #{tpu_custom_call.1} parent=55 // loop_footer
                %s2137 = sadd.s32 1, %s2133
              $region62: #{tpu_custom_call.1} parent=55 // loop_footer_branch
                %2132 = sbr.rel target = $region58
              $region63: #{tpu_custom_call.1} parent=55 // loop_exit
                _
            $region56: #{tpu_custom_call.1} parent=47 // pred_fallthru
              _
          $region48: #{tpu_custom_call.1} parent=43 // pred_fallthru
            _
          %2408 = vnop
        $region44: #{tpu_custom_call.1} parent=39 // pred_fallthru
          _
      $region40: #{tpu_custom_call.1} parent=5 // pred_fallthru
        _
      %p2409 = scmp.le.s32.totalorder 2, %s11
      // Predicated region
      $region79: #{tpu_custom_call.1} parent=5 // pred_check
        %p2410 = pneg %p2409
      $region80: #{tpu_custom_call.1} parent=5 // pred_check_branch
        %2412 = sbr.rel (%p2410) target = $region82
      $region81: #{tpu_custom_call.1} parent=5 // pred_region
        %s2413 = ssub.s32 %s11, 2
        // Predicated region
        $region83: #{tpu_custom_call.1} parent=81 // pred_check
          %p2414 = pneg %p190
        $region84: #{tpu_custom_call.1} parent=81 // pred_check_branch
          %2416 = sbr.rel (%p2414) target = $region86
        $region85: #{tpu_custom_call.1} parent=81 // pred_region
          %s2417 = sand.u32 %s175, 1
          %s2418 = sand.u32 %s175, 1
          %s2419 = smul.addr %s2418, 512
          %s2420 = scalar_lea.vmem [#allocation2], %s2419
        $region86: #{tpu_custom_call.1} parent=81 // pred_fallthru
          _
      $region82: #{tpu_custom_call.1} parent=5 // pred_fallthru
        _
    $region6: #{tpu_custom_call.1} parent=1 // loop_footer
      %s15 = sadd.s32 1, %s11
    $region7: #{tpu_custom_call.1} parent=1 // loop_footer_branch
      %10 = sbr.rel target = $region3
    $region8: #{tpu_custom_call.1} parent=1 // loop_exit
      _

</llo_original>
